<compile_context>
chip_gen: v6e
topology: v6e:2x2x1
jax: 0.10.0
libtpu: 0.0.40
codegen_flags: <defaults>
</compile_context>

<pallas_src>
import jax
import jax.numpy as jnp
from jax.experimental import pallas as pl
from jax.experimental.pallas import tpu as pltpu

NCLASSES = 20
H1 = 320        # fc1 width
H2 = 50         # fc2 width (logical)
H2_PAD = 128    # fc2 width padded to lane width
OUT_PAD = 128   # logits width padded to lane width


def _round_up(a, m):
    return (a + m - 1) // m * m


def _mlp_kernel(x_ref, w1_ref, b1_ref, w2_ref, b2_ref, w3_ref, b3_ref, o_ref):
    # TODO(synk): dropout(p=0.3) is identity in eval mode; training-mode
    # stochastic masking (pltpu.prng_seed / prng_random_bits) intentionally omitted.
    x = x_ref[...].astype(jnp.bfloat16)

    # fc1 + ReLU  (bf16 MXU operands, f32 accumulate)
    h1 = jnp.dot(x, w1_ref[...], preferred_element_type=jnp.float32) + b1_ref[...]
    h1 = jnp.maximum(h1, 0.0)

    # fc2 + ReLU  (output padded 50 -> 128 lanes; padded columns stay 0)
    h2 = (
        jnp.dot(h1.astype(jnp.bfloat16), w2_ref[...],
                preferred_element_type=jnp.float32)
        + b2_ref[...]
    )
    h2 = jnp.maximum(h2, 0.0)

    # fc3 logits (padded 20 -> 128 lanes for a lane-dense output slab)
    o_ref[...] = (
        jnp.dot(h2.astype(jnp.bfloat16), w3_ref[...],
                preferred_element_type=jnp.float32)
        + b3_ref[...]
    )


def init_params(key, in_features):
    """PyTorch nn.Linear-style init. Logical (unpadded) shapes, f32."""
    ks = jax.random.split(key, 6)

    def linear(kw, kb, fan_in, fan_out):
        bound = 1.0 / jnp.sqrt(fan_in)
        w = jax.random.uniform(kw, (fan_in, fan_out), jnp.float32, -bound, bound)
        b = jax.random.uniform(kb, (fan_out,), jnp.float32, -bound, bound)
        return w, b

    w1, b1 = linear(ks[0], ks[1], in_features, H1)
    w2, b2 = linear(ks[2], ks[3], H1, H2)
    w3, b3 = linear(ks[4], ks[5], H2, NCLASSES)
    return (w1, b1, w2, b2, w3, b3)


def prepare_params(params):
    """Pad narrow dims to 128 lanes; cast matmul weights to bf16 (biases f32)."""
    w1, b1, w2, b2, w3, b3 = params
    w1p = w1.astype(jnp.bfloat16)
    b1p = b1.reshape(1, H1).astype(jnp.float32)

    w2p = jnp.zeros((H1, H2_PAD), jnp.bfloat16).at[:, :H2].set(w2.astype(jnp.bfloat16))
    b2p = jnp.zeros((1, H2_PAD), jnp.float32).at[:, :H2].set(b2.reshape(1, H2))

    w3p = jnp.zeros((H2_PAD, OUT_PAD), jnp.bfloat16).at[:H2, :NCLASSES].set(
        w3.astype(jnp.bfloat16))
    b3p = jnp.zeros((1, OUT_PAD), jnp.float32).at[:, :NCLASSES].set(
        b3.reshape(1, NCLASSES))
    return (w1p, b1p, w2p, b2p, w3p, b3p)


def classifier_forward(x, padded_params):
    """x: any shape whose trailing dims flatten to in_features. Returns (N, 20)."""
    w1, b1, w2, b2, w3, b3 = padded_params
    in_features = w1.shape[0]

    x2d = x.reshape(-1, in_features)   # no wrapper-side astype (cast is in-kernel)
    n = x2d.shape[0]

    # Row tile: large (up to 1024 rows) for pipelining/roofline; multiple of 8.
    tm = min(1024, _round_up(max(n, 1), 8))
    n_pad = _round_up(n, tm)
    if n_pad != n:
        x2d = jnp.pad(x2d, ((0, n_pad - n), (0, 0)))

    grid = (n_pad // tm,)

    x_spec = pl.BlockSpec((tm, in_features), lambda i: (i, 0))
    out_spec = pl.BlockSpec((tm, OUT_PAD), lambda i: (i, 0))
    resident = lambda shape: pl.BlockSpec(shape, lambda i: (0, 0))  # VMEM-resident

    flops = 2 * n_pad * (in_features * H1 + H1 * H2_PAD + H2_PAD * OUT_PAD)
    bytes_accessed = (
        int(x2d.size) * x2d.dtype.itemsize
        + sum(int(p.size) * p.dtype.itemsize for p in padded_params)
        + n_pad * OUT_PAD * 4
    )

    out = pl.pallas_call(
        _mlp_kernel,
        out_shape=jax.ShapeDtypeStruct((n_pad, OUT_PAD), jnp.float32),
        grid=grid,
        in_specs=[
            x_spec,
            resident(w1.shape), resident(b1.shape),
            resident(w2.shape), resident(b2.shape),
            resident(w3.shape), resident(b3.shape),
        ],
        out_specs=out_spec,
        compiler_params=pltpu.CompilerParams(dimension_semantics=("parallel",)),
        cost_estimate=pl.CostEstimate(
            flops=flops, transcendentals=0, bytes_accessed=bytes_accessed),
    )(x2d, w1, b1, w2, b2, w3, b3)

    return out[:n, :NCLASSES]


def reference_forward(x, params):
    """Pure-JAX f32 reference (eval-mode dropout = identity)."""
    w1, b1, w2, b2, w3, b3 = params
    x2d = x.reshape(-1, w1.shape[0]).astype(jnp.float32)
    h1 = jnp.maximum(x2d @ w1 + b1, 0.0)
    h2 = jnp.maximum(h1 @ w2 + b2, 0.0)
    return h2 @ w3 + b3


if __name__ == "__main__":
    key = jax.random.PRNGKey(0)
    k_x, k_p = jax.random.split(key)

    # Small NCHW-ish input: (batch=2, channels=4, H=16, W=16) -> in_features=1024
    x = jax.random.normal(k_x, (2, 4, 16, 16), dtype=jnp.float32)
    in_features = 4 * 16 * 16

    params = init_params(k_p, in_features)
    padded_params = prepare_params(params)

    out = classifier_forward(x, padded_params)
    jax.block_until_ready(out)

    ref = reference_forward(x, params)
    assert out.shape == (2, NCLASSES)
    # bf16 MXU operands vs f32 reference -> relaxed tolerance.
    assert jnp.allclose(out, ref, atol=5e-2, rtol=5e-2), (
        f"mismatch vs reference, max abs err = {jnp.max(jnp.abs(out - ref))}")

    print("KERNEL_OK")
</pallas_src>

<mosaic_0001>
module attributes {stable_mosaic.version = 11 : i64} {
  func.func @_mlp_kernel(%arg0: i32, %arg1: memref<8x1024xf32, #tpu.memory_space<vmem>>, %arg2: memref<1024x320xbf16, #tpu.memory_space<vmem>>, %arg3: memref<1x320xf32, #tpu.memory_space<vmem>>, %arg4: memref<320x128xbf16, #tpu.memory_space<vmem>>, %arg5: memref<1x128xf32, #tpu.memory_space<vmem>>, %arg6: memref<128x128xbf16, #tpu.memory_space<vmem>>, %arg7: memref<1x128xf32, #tpu.memory_space<vmem>>, %arg8: memref<8x128xf32, #tpu.memory_space<vmem>>) attributes {dimension_semantics = [#tpu.dimension_semantics<parallel>], iteration_bounds = array<i64: 1>, scalar_prefetch = 0 : i64, scratch_operands = 0 : i64, tpu.core_type = #tpu.core_type<tc>, window_params = [{transform_indices = @transform_0, window_bounds = array<i64: 8, 1024>}, {pipeline_mode = #tpu.pipeline_mode<synchronous>, transform_indices = @transform_1, window_bounds = array<i64: 1024, 320>}, {pipeline_mode = #tpu.pipeline_mode<synchronous>, transform_indices = @transform_2, window_bounds = array<i64: 1, 320>}, {pipeline_mode = #tpu.pipeline_mode<synchronous>, transform_indices = @transform_3, window_bounds = array<i64: 320, 128>}, {pipeline_mode = #tpu.pipeline_mode<synchronous>, transform_indices = @transform_4, window_bounds = array<i64: 1, 128>}, {pipeline_mode = #tpu.pipeline_mode<synchronous>, transform_indices = @transform_5, window_bounds = array<i64: 128, 128>}, {pipeline_mode = #tpu.pipeline_mode<synchronous>, transform_indices = @transform_6, window_bounds = array<i64: 1, 128>}, {transform_indices = @transform_7, window_bounds = array<i64: 8, 128>}]} {
    %c0 = arith.constant 0 : index
    %c0_0 = arith.constant 0 : index
    %0 = vector.load %arg1[%c0, %c0_0] : memref<8x1024xf32, #tpu.memory_space<vmem>>, vector<8x1024xf32>
    %1 = arith.truncf %0 : vector<8x1024xf32> to vector<8x1024xbf16>
    %c0_1 = arith.constant 0 : index
    %c0_2 = arith.constant 0 : index
    %2 = vector.load %arg2[%c0_1, %c0_2] : memref<1024x320xbf16, #tpu.memory_space<vmem>>, vector<1024x320xbf16>
    %cst = arith.constant dense<0.000000e+00> : vector<8x320xf32>
    %3 = tpu.matmul %1, %2, %cst {dimension_numbers = #tpu.dot_dimension_numbers<[1], [0], [0], [1], [0, 0, 1, 1], [], []>} : vector<8x1024xbf16>, vector<1024x320xbf16>, vector<8x320xf32> -> vector<8x320xf32>
    %c0_3 = arith.constant 0 : index
    %c0_4 = arith.constant 0 : index
    %4 = vector.load %arg3[%c0_3, %c0_4] : memref<1x320xf32, #tpu.memory_space<vmem>>, vector<1x320xf32>
    %5 = vector.broadcast %4 : vector<1x320xf32> to vector<8x320xf32>
    %6 = arith.addf %3, %5 : vector<8x320xf32>
    %cst_5 = arith.constant 0.000000e+00 : f32
    %7 = vector.broadcast %cst_5 : f32 to vector<8x320xf32>
    %8 = arith.maximumf %6, %7 : vector<8x320xf32>
    %9 = arith.truncf %8 : vector<8x320xf32> to vector<8x320xbf16>
    %c0_6 = arith.constant 0 : index
    %c0_7 = arith.constant 0 : index
    %10 = vector.load %arg4[%c0_6, %c0_7] : memref<320x128xbf16, #tpu.memory_space<vmem>>, vector<320x128xbf16>
    %cst_8 = arith.constant dense<0.000000e+00> : vector<8x128xf32>
    %11 = tpu.matmul %9, %10, %cst_8 {dimension_numbers = #tpu.dot_dimension_numbers<[1], [0], [0], [1], [0, 0, 1, 1], [], []>} : vector<8x320xbf16>, vector<320x128xbf16>, vector<8x128xf32> -> vector<8x128xf32>
    %c0_9 = arith.constant 0 : index
    %c0_10 = arith.constant 0 : index
    %12 = vector.load %arg5[%c0_9, %c0_10] : memref<1x128xf32, #tpu.memory_space<vmem>>, vector<1x128xf32>
    %13 = vector.broadcast %12 : vector<1x128xf32> to vector<8x128xf32>
    %14 = arith.addf %11, %13 : vector<8x128xf32>
    %cst_11 = arith.constant 0.000000e+00 : f32
    %15 = vector.broadcast %cst_11 : f32 to vector<8x128xf32>
    %16 = arith.maximumf %14, %15 : vector<8x128xf32>
    %17 = arith.truncf %16 : vector<8x128xf32> to vector<8x128xbf16>
    %c0_12 = arith.constant 0 : index
    %c0_13 = arith.constant 0 : index
    %18 = vector.load %arg6[%c0_12, %c0_13] : memref<128x128xbf16, #tpu.memory_space<vmem>>, vector<128x128xbf16>
    %cst_14 = arith.constant dense<0.000000e+00> : vector<8x128xf32>
    %19 = tpu.matmul %17, %18, %cst_14 {dimension_numbers = #tpu.dot_dimension_numbers<[1], [0], [0], [1], [0, 0, 1, 1], [], []>} : vector<8x128xbf16>, vector<128x128xbf16>, vector<8x128xf32> -> vector<8x128xf32>
    %c0_15 = arith.constant 0 : index
    %c0_16 = arith.constant 0 : index
    %20 = vector.load %arg7[%c0_15, %c0_16] : memref<1x128xf32, #tpu.memory_space<vmem>>, vector<1x128xf32>
    %21 = vector.broadcast %20 : vector<1x128xf32> to vector<8x128xf32>
    %22 = arith.addf %19, %21 : vector<8x128xf32>
    %c0_17 = arith.constant 0 : index
    %c0_18 = arith.constant 0 : index
    %23 = vector.load %arg8[%c0_17, %c0_18] : memref<8x128xf32, #tpu.memory_space<vmem>>, vector<8x128xf32>
    tpu.vector_store %arg8[%c0_17, %c0_18], %22 {strides = array<i32>} : memref<8x128xf32, #tpu.memory_space<vmem>>, vector<8x128xf32>,
    return
  }
  func.func @transform_0(%arg0: i32) -> (i32, i32) {
    %c0_i32 = arith.constant 0 : i32
    %c0_i32_0 = arith.constant 0 : i32
    return %arg0, %c0_i32 : i32, i32
  }
  func.func @transform_1(%arg0: i32) -> (i32, i32) {
    %c0_i32 = arith.constant 0 : i32
    %c0_i32_0 = arith.constant 0 : i32
    %c0_i32_1 = arith.constant 0 : i32
    return %c0_i32, %c0_i32_0 : i32, i32
  }
  func.func @transform_2(%arg0: i32) -> (i32, i32) {
    %c0_i32 = arith.constant 0 : i32
    %c0_i32_0 = arith.constant 0 : i32
    %c0_i32_1 = arith.constant 0 : i32
    return %c0_i32, %c0_i32_0 : i32, i32
  }
  func.func @transform_3(%arg0: i32) -> (i32, i32) {
    %c0_i32 = arith.constant 0 : i32
    %c0_i32_0 = arith.constant 0 : i32
    %c0_i32_1 = arith.constant 0 : i32
    return %c0_i32, %c0_i32_0 : i32, i32
  }
  func.func @transform_4(%arg0: i32) -> (i32, i32) {
    %c0_i32 = arith.constant 0 : i32
    %c0_i32_0 = arith.constant 0 : i32
    %c0_i32_1 = arith.constant 0 : i32
    return %c0_i32, %c0_i32_0 : i32, i32
  }
  func.func @transform_5(%arg0: i32) -> (i32, i32) {
    %c0_i32 = arith.constant 0 : i32
    %c0_i32_0 = arith.constant 0 : i32
    %c0_i32_1 = arith.constant 0 : i32
    return %c0_i32, %c0_i32_0 : i32, i32
  }
  func.func @transform_6(%arg0: i32) -> (i32, i32) {
    %c0_i32 = arith.constant 0 : i32
    %c0_i32_0 = arith.constant 0 : i32
    %c0_i32_1 = arith.constant 0 : i32
    return %c0_i32, %c0_i32_0 : i32, i32
  }
  func.func @transform_7(%arg0: i32) -> (i32, i32) {
    %c0_i32 = arith.constant 0 : i32
    %c0_i32_0 = arith.constant 0 : i32
    return %arg0, %c0_i32 : i32, i32
  }
}

</mosaic_0001>

<llo_original>
// kernel: tpu_custom_call.1
$region0: #{tpu_custom_call.1}
  #allocation0 [shape = 'u32[]', space=smem, size = 0x4, offset = 0x4, fixed_abs, tag = 'smem constant byte address 0x4 - core index']
  #allocation1 [shape = 'u32[144,128]{1,0:T(1,128)}', space=vmem, size = 0x12000, scoped, tag = 'internal scratch']
  %s0 = inlined_call_operand.vmem [shape: f32[8,1024], index: 0, kind: input, shape index: {}]
  %s1 = inlined_call_operand.vmem [shape: bf16[1024,320], index: 1, kind: input, shape index: {}]
  %s2 = inlined_call_operand.vmem [shape: f32[1,320], index: 2, kind: input, shape index: {}]
  %s3 = inlined_call_operand.vmem [shape: bf16[320,128], index: 3, kind: input, shape index: {}]
  %s4 = inlined_call_operand.vmem [shape: f32[1,128], index: 4, kind: input, shape index: {}]
  %s5 = inlined_call_operand.vmem [shape: bf16[128,128], index: 5, kind: input, shape index: {}]
  %s6 = inlined_call_operand.vmem [shape: f32[1,128], index: 6, kind: input, shape index: {}]
  %s7 = inlined_call_operand.hbm [shape: f32[8,128], index: 7, kind: output, shape index: {}]
  %s8 = sld [smem:[#allocation0]]
  $region38: #{tpu_custom_call.1} parent=0
    _
  %s10 = ssub.s32 1, %s8
  %s11 = scalar_select 0, %s10, %s8
  $region1: #{tpu_custom_call.1} parent=0
    #allocation2 [shape = 'u8[4096]{0}', space=vmem, size = 0x1000, scoped, tag = 'output window, operand 0, single buffered']
    #allocation3 [shape = 's32[1]{0}', space=sflag, size = 0x4, scoped, tag = 'scoped memory for tpu_custom_call.1']
    %12 = vsyncpa [#allocation3], 0
    // Predicated region
    $region2: #{tpu_custom_call.1} parent=1 // pred_check
      _
    $region3: #{tpu_custom_call.1} parent=1 // pred_check_branch
      %14 = sbr.rel (0) target = $region5
    $region4: #{tpu_custom_call.1} parent=1 // pred_region
      _
    $region5: #{tpu_custom_call.1} parent=1 // pred_fallthru
      _
    // Predicated region
    $region6: #{tpu_custom_call.1} parent=1 // pred_check
      _
    $region7: #{tpu_custom_call.1} parent=1 // pred_check_branch
      %16 = sbr.rel (0) target = $region9
    $region8: #{tpu_custom_call.1} parent=1 // pred_region
      _
    $region9: #{tpu_custom_call.1} parent=1 // pred_fallthru
      _
    // Predicated region
    $region10: #{tpu_custom_call.1} parent=1 // pred_check
      _
    $region11: #{tpu_custom_call.1} parent=1 // pred_check_branch
      %18 = sbr.rel (0) target = $region13
    $region12: #{tpu_custom_call.1} parent=1 // pred_region
      _
    $region13: #{tpu_custom_call.1} parent=1 // pred_fallthru
      _
    // Predicated region
    $region14: #{tpu_custom_call.1} parent=1 // pred_check
      _
    $region15: #{tpu_custom_call.1} parent=1 // pred_check_branch
      %20 = sbr.rel (0) target = $region17
    $region16: #{tpu_custom_call.1} parent=1 // pred_region
      _
    $region17: #{tpu_custom_call.1} parent=1 // pred_fallthru
      _
    // Predicated region
    $region18: #{tpu_custom_call.1} parent=1 // pred_check
      _
    $region19: #{tpu_custom_call.1} parent=1 // pred_check_branch
      %22 = sbr.rel (0) target = $region21
    $region20: #{tpu_custom_call.1} parent=1 // pred_region
      _
    $region21: #{tpu_custom_call.1} parent=1 // pred_fallthru
      _
    // Predicated region
    $region22: #{tpu_custom_call.1} parent=1 // pred_check
      _
    $region23: #{tpu_custom_call.1} parent=1 // pred_check_branch
      %24 = sbr.rel (0) target = $region25
    $region24: #{tpu_custom_call.1} parent=1 // pred_region
      _
    $region25: #{tpu_custom_call.1} parent=1 // pred_fallthru
      _
    // Predicated region
    $region26: #{tpu_custom_call.1} parent=1 // pred_check
      _
    $region27: #{tpu_custom_call.1} parent=1 // pred_check_branch
      %26 = sbr.rel (0) target = $region29
    $region28: #{tpu_custom_call.1} parent=1 // pred_region
      _
    $region29: #{tpu_custom_call.1} parent=1 // pred_fallthru
      _
    %v28 = vld [vmem:[%s0] sm:$0xff]
    %v29 = vld [vmem:[%s0 + $0x8] sm:$0xff]
    %v30 = vld [vmem:[%s0 + $0x10] sm:$0xff]
    %v31 = vld [vmem:[%s0 + $0x18] sm:$0xff]
    %v32 = vld [vmem:[%s0 + $0x20] sm:$0xff]
    %v33 = vld [vmem:[%s0 + $0x28] sm:$0xff]
    %v34 = vld [vmem:[%s0 + $0x30] sm:$0xff]
    %v35 = vld [vmem:[%s0 + $0x38] sm:$0xff]
    %v36 = vpack.c.bf16 %v28, %v28
    %v37 = vpack.c.bf16 %v29, %v29
    %v38 = vpack.c.bf16 %v30, %v30
    %v39 = vpack.c.bf16 %v31, %v31
    %v40 = vpack.c.bf16 %v32, %v32
    %v41 = vpack.c.bf16 %v33, %v33
    %v42 = vpack.c.bf16 %v34, %v34
    %v43 = vpack.c.bf16 %v35, %v35
    %v44 = vld [vmem:[%s1] sm:$0xff]
    %v45 = vld [vmem:[%s1 + $0x8] sm:$0xf]
    %v46 = vld [vmem:[%s1 + $0xc] sm:$0xff]
    %v47 = vld [vmem:[%s1 + $0x14] sm:$0xf]
    %v48 = vld [vmem:[%s1 + $0x18] sm:$0xff]
    %v49 = vld [vmem:[%s1 + $0x20] sm:$0xf]
    %v50 = vld [vmem:[%s1 + $0x24] sm:$0xff]
    %v51 = vld [vmem:[%s1 + $0x2c] sm:$0xf]
    %v52 = vld [vmem:[%s1 + $0x30] sm:$0xff]
    %v53 = vld [vmem:[%s1 + $0x38] sm:$0xf]
    %v54 = vld [vmem:[%s1 + $0x3c] sm:$0xff]
    %v55 = vld [vmem:[%s1 + $0x44] sm:$0xf]
    %v56 = vld [vmem:[%s1 + $0x48] sm:$0xff]
    %v57 = vld [vmem:[%s1 + $0x50] sm:$0xf]
    %v58 = vld [vmem:[%s1 + $0x54] sm:$0xff]
    %v59 = vld [vmem:[%s1 + $0x5c] sm:$0xf]
    %v60 = vld [vmem:[%s1 + $0x60] sm:$0xff]
    %v61 = vld [vmem:[%s1 + $0x68] sm:$0xf]
    %v62 = vld [vmem:[%s1 + $0x6c] sm:$0xff]
    %v63 = vld [vmem:[%s1 + $0x74] sm:$0xf]
    %v64 = vld [vmem:[%s1 + $0x78] sm:$0xff]
    %v65 = vld [vmem:[%s1 + $0x80] sm:$0xf]
    %v66 = vld [vmem:[%s1 + $0x84] sm:$0xff]
    %v67 = vld [vmem:[%s1 + $0x8c] sm:$0xf]
    %v68 = vld [vmem:[%s1 + $0x90] sm:$0xff]
    %v69 = vld [vmem:[%s1 + $0x98] sm:$0xf]
    %v70 = vld [vmem:[%s1 + $0x9c] sm:$0xff]
    %v71 = vld [vmem:[%s1 + $0xa4] sm:$0xf]
    %v72 = vld [vmem:[%s1 + $0xa8] sm:$0xff]
    %v73 = vld [vmem:[%s1 + $0xb0] sm:$0xf]
    %v74 = vld [vmem:[%s1 + $0xb4] sm:$0xff]
    %v75 = vld [vmem:[%s1 + $0xbc] sm:$0xf]
    %v76 = vld [vmem:[%s1 + $0xc0] sm:$0xff]
    %v77 = vld [vmem:[%s1 + $0xc8] sm:$0xf]
    %v78 = vld [vmem:[%s1 + $0xcc] sm:$0xff]
    %v79 = vld [vmem:[%s1 + $0xd4] sm:$0xf]
    %v80 = vld [vmem:[%s1 + $0xd8] sm:$0xff]
    %v81 = vld [vmem:[%s1 + $0xe0] sm:$0xf]
    %v82 = vld [vmem:[%s1 + $0xe4] sm:$0xff]
    %v83 = vld [vmem:[%s1 + $0xec] sm:$0xf]
    %v84 = vld [vmem:[%s1 + $0xf0] sm:$0xff]
    %v85 = vld [vmem:[%s1 + $0xf8] sm:$0xf]
    %v86 = vld [vmem:[%s1 + $0xfc] sm:$0xff]
    %v87 = vld [vmem:[%s1 + $0x104] sm:$0xf]
    %v88 = vld [vmem:[%s1 + $0x108] sm:$0xff]
    %v89 = vld [vmem:[%s1 + $0x110] sm:$0xf]
    %v90 = vld [vmem:[%s1 + $0x114] sm:$0xff]
    %v91 = vld [vmem:[%s1 + $0x11c] sm:$0xf]
    %v92 = vld [vmem:[%s1 + $0x120] sm:$0xff]
    %v93 = vld [vmem:[%s1 + $0x128] sm:$0xf]
    %v94 = vld [vmem:[%s1 + $0x12c] sm:$0xff]
    %v95 = vld [vmem:[%s1 + $0x134] sm:$0xf]
    %v96 = vld [vmem:[%s1 + $0x138] sm:$0xff]
    %v97 = vld [vmem:[%s1 + $0x140] sm:$0xf]
    %v98 = vld [vmem:[%s1 + $0x144] sm:$0xff]
    %v99 = vld [vmem:[%s1 + $0x14c] sm:$0xf]
    %v100 = vld [vmem:[%s1 + $0x150] sm:$0xff]
    %v101 = vld [vmem:[%s1 + $0x158] sm:$0xf]
    %v102 = vld [vmem:[%s1 + $0x15c] sm:$0xff]
    %v103 = vld [vmem:[%s1 + $0x164] sm:$0xf]
    %v104 = vld [vmem:[%s1 + $0x168] sm:$0xff]
    %v105 = vld [vmem:[%s1 + $0x170] sm:$0xf]
    %v106 = vld [vmem:[%s1 + $0x174] sm:$0xff]
    %v107 = vld [vmem:[%s1 + $0x17c] sm:$0xf]
    %v108 = vld [vmem:[%s1 + $0x180] sm:$0xff]
    %v109 = vld [vmem:[%s1 + $0x188] sm:$0xf]
    %v110 = vld [vmem:[%s1 + $0x18c] sm:$0xff]
    %v111 = vld [vmem:[%s1 + $0x194] sm:$0xf]
    %v112 = vld [vmem:[%s1 + $0x198] sm:$0xff]
    %v113 = vld [vmem:[%s1 + $0x1a0] sm:$0xf]
    %v114 = vld [vmem:[%s1 + $0x1a4] sm:$0xff]
    %v115 = vld [vmem:[%s1 + $0x1ac] sm:$0xf]
    %v116 = vld [vmem:[%s1 + $0x1b0] sm:$0xff]
    %v117 = vld [vmem:[%s1 + $0x1b8] sm:$0xf]
    %v118 = vld [vmem:[%s1 + $0x1bc] sm:$0xff]
    %v119 = vld [vmem:[%s1 + $0x1c4] sm:$0xf]
    %v120 = vld [vmem:[%s1 + $0x1c8] sm:$0xff]
    %v121 = vld [vmem:[%s1 + $0x1d0] sm:$0xf]
    %v122 = vld [vmem:[%s1 + $0x1d4] sm:$0xff]
    %v123 = vld [vmem:[%s1 + $0x1dc] sm:$0xf]
    %v124 = vld [vmem:[%s1 + $0x1e0] sm:$0xff]
    %v125 = vld [vmem:[%s1 + $0x1e8] sm:$0xf]
    %v126 = vld [vmem:[%s1 + $0x1ec] sm:$0xff]
    %v127 = vld [vmem:[%s1 + $0x1f4] sm:$0xf]
    %v128 = vld [vmem:[%s1 + $0x1f8] sm:$0xff]
    %v129 = vld [vmem:[%s1 + $0x200] sm:$0xf]
    %v130 = vld [vmem:[%s1 + $0x204] sm:$0xff]
    %v131 = vld [vmem:[%s1 + $0x20c] sm:$0xf]
    %v132 = vld [vmem:[%s1 + $0x210] sm:$0xff]
    %v133 = vld [vmem:[%s1 + $0x218] sm:$0xf]
    %v134 = vld [vmem:[%s1 + $0x21c] sm:$0xff]
    %v135 = vld [vmem:[%s1 + $0x224] sm:$0xf]
    %v136 = vld [vmem:[%s1 + $0x228] sm:$0xff]
    %v137 = vld [vmem:[%s1 + $0x230] sm:$0xf]
    %v138 = vld [vmem:[%s1 + $0x234] sm:$0xff]
    %v139 = vld [vmem:[%s1 + $0x23c] sm:$0xf]
    %v140 = vld [vmem:[%s1 + $0x240] sm:$0xff]
    %v141 = vld [vmem:[%s1 + $0x248] sm:$0xf]
    %v142 = vld [vmem:[%s1 + $0x24c] sm:$0xff]
    %v143 = vld [vmem:[%s1 + $0x254] sm:$0xf]
    %v144 = vld [vmem:[%s1 + $0x258] sm:$0xff]
    %v145 = vld [vmem:[%s1 + $0x260] sm:$0xf]
    %v146 = vld [vmem:[%s1 + $0x264] sm:$0xff]
    %v147 = vld [vmem:[%s1 + $0x26c] sm:$0xf]
    %v148 = vld [vmem:[%s1 + $0x270] sm:$0xff]
    %v149 = vld [vmem:[%s1 + $0x278] sm:$0xf]
    %v150 = vld [vmem:[%s1 + $0x27c] sm:$0xff]
    %v151 = vld [vmem:[%s1 + $0x284] sm:$0xf]
    %v152 = vld [vmem:[%s1 + $0x288] sm:$0xff]
    %v153 = vld [vmem:[%s1 + $0x290] sm:$0xf]
    %v154 = vld [vmem:[%s1 + $0x294] sm:$0xff]
    %v155 = vld [vmem:[%s1 + $0x29c] sm:$0xf]
    %v156 = vld [vmem:[%s1 + $0x2a0] sm:$0xff]
    %v157 = vld [vmem:[%s1 + $0x2a8] sm:$0xf]
    %v158 = vld [vmem:[%s1 + $0x2ac] sm:$0xff]
    %v159 = vld [vmem:[%s1 + $0x2b4] sm:$0xf]
    %v160 = vld [vmem:[%s1 + $0x2b8] sm:$0xff]
    %v161 = vld [vmem:[%s1 + $0x2c0] sm:$0xf]
    %v162 = vld [vmem:[%s1 + $0x2c4] sm:$0xff]
    %v163 = vld [vmem:[%s1 + $0x2cc] sm:$0xf]
    %v164 = vld [vmem:[%s1 + $0x2d0] sm:$0xff]
    %v165 = vld [vmem:[%s1 + $0x2d8] sm:$0xf]
    %v166 = vld [vmem:[%s1 + $0x2dc] sm:$0xff]
    %v167 = vld [vmem:[%s1 + $0x2e4] sm:$0xf]
    %v168 = vld [vmem:[%s1 + $0x2e8] sm:$0xff]
    %v169 = vld [vmem:[%s1 + $0x2f0] sm:$0xf]
    %v170 = vld [vmem:[%s1 + $0x2f4] sm:$0xff]
    %v171 = vld [vmem:[%s1 + $0x2fc] sm:$0xf]
    %v172 = vld [vmem:[%s1 + $0x300] sm:$0xff]
    %v173 = vld [vmem:[%s1 + $0x308] sm:$0xf]
    %v174 = vld [vmem:[%s1 + $0x30c] sm:$0xff]
    %v175 = vld [vmem:[%s1 + $0x314] sm:$0xf]
    %v176 = vld [vmem:[%s1 + $0x318] sm:$0xff]
    %v177 = vld [vmem:[%s1 + $0x320] sm:$0xf]
    %v178 = vld [vmem:[%s1 + $0x324] sm:$0xff]
    %v179 = vld [vmem:[%s1 + $0x32c] sm:$0xf]
    %v180 = vld [vmem:[%s1 + $0x330] sm:$0xff]
    %v181 = vld [vmem:[%s1 + $0x338] sm:$0xf]
    %v182 = vld [vmem:[%s1 + $0x33c] sm:$0xff]
    %v183 = vld [vmem:[%s1 + $0x344] sm:$0xf]
    %v184 = vld [vmem:[%s1 + $0x348] sm:$0xff]
    %v185 = vld [vmem:[%s1 + $0x350] sm:$0xf]
    %v186 = vld [vmem:[%s1 + $0x354] sm:$0xff]
    %v187 = vld [vmem:[%s1 + $0x35c] sm:$0xf]
    %v188 = vld [vmem:[%s1 + $0x360] sm:$0xff]
    %v189 = vld [vmem:[%s1 + $0x368] sm:$0xf]
    %v190 = vld [vmem:[%s1 + $0x36c] sm:$0xff]
    %v191 = vld [vmem:[%s1 + $0x374] sm:$0xf]
    %v192 = vld [vmem:[%s1 + $0x378] sm:$0xff]
    %v193 = vld [vmem:[%s1 + $0x380] sm:$0xf]
    %v194 = vld [vmem:[%s1 + $0x384] sm:$0xff]
    %v195 = vld [vmem:[%s1 + $0x38c] sm:$0xf]
    %v196 = vld [vmem:[%s1 + $0x390] sm:$0xff]
    %v197 = vld [vmem:[%s1 + $0x398] sm:$0xf]
    %v198 = vld [vmem:[%s1 + $0x39c] sm:$0xff]
    %v199 = vld [vmem:[%s1 + $0x3a4] sm:$0xf]
    %v200 = vld [vmem:[%s1 + $0x3a8] sm:$0xff]
    %v201 = vld [vmem:[%s1 + $0x3b0] sm:$0xf]
    %v202 = vld [vmem:[%s1 + $0x3b4] sm:$0xff]
    %v203 = vld [vmem:[%s1 + $0x3bc] sm:$0xf]
    %v204 = vld [vmem:[%s1 + $0x3c0] sm:$0xff]
    %v205 = vld [vmem:[%s1 + $0x3c8] sm:$0xf]
    %v206 = vld [vmem:[%s1 + $0x3cc] sm:$0xff]
    %v207 = vld [vmem:[%s1 + $0x3d4] sm:$0xf]
    %v208 = vld [vmem:[%s1 + $0x3d8] sm:$0xff]
    %v209 = vld [vmem:[%s1 + $0x3e0] sm:$0xf]
    %v210 = vld [vmem:[%s1 + $0x3e4] sm:$0xff]
    %v211 = vld [vmem:[%s1 + $0x3ec] sm:$0xf]
    %v212 = vld [vmem:[%s1 + $0x3f0] sm:$0xff]
    %v213 = vld [vmem:[%s1 + $0x3f8] sm:$0xf]
    %v214 = vld [vmem:[%s1 + $0x3fc] sm:$0xff]
    %v215 = vld [vmem:[%s1 + $0x404] sm:$0xf]
    %v216 = vld [vmem:[%s1 + $0x408] sm:$0xff]
    %v217 = vld [vmem:[%s1 + $0x410] sm:$0xf]
    %v218 = vld [vmem:[%s1 + $0x414] sm:$0xff]
    %v219 = vld [vmem:[%s1 + $0x41c] sm:$0xf]
    %v220 = vld [vmem:[%s1 + $0x420] sm:$0xff]
    %v221 = vld [vmem:[%s1 + $0x428] sm:$0xf]
    %v222 = vld [vmem:[%s1 + $0x42c] sm:$0xff]
    %v223 = vld [vmem:[%s1 + $0x434] sm:$0xf]
    %v224 = vld [vmem:[%s1 + $0x438] sm:$0xff]
    %v225 = vld [vmem:[%s1 + $0x440] sm:$0xf]
    %v226 = vld [vmem:[%s1 + $0x444] sm:$0xff]
    %v227 = vld [vmem:[%s1 + $0x44c] sm:$0xf]
    %v228 = vld [vmem:[%s1 + $0x450] sm:$0xff]
    %v229 = vld [vmem:[%s1 + $0x458] sm:$0xf]
    %v230 = vld [vmem:[%s1 + $0x45c] sm:$0xff]
    %v231 = vld [vmem:[%s1 + $0x464] sm:$0xf]
    %v232 = vld [vmem:[%s1 + $0x468] sm:$0xff]
    %v233 = vld [vmem:[%s1 + $0x470] sm:$0xf]
    %v234 = vld [vmem:[%s1 + $0x474] sm:$0xff]
    %v235 = vld [vmem:[%s1 + $0x47c] sm:$0xf]
    %v236 = vld [vmem:[%s1 + $0x480] sm:$0xff]
    %v237 = vld [vmem:[%s1 + $0x488] sm:$0xf]
    %v238 = vld [vmem:[%s1 + $0x48c] sm:$0xff]
    %v239 = vld [vmem:[%s1 + $0x494] sm:$0xf]
    %v240 = vld [vmem:[%s1 + $0x498] sm:$0xff]
    %v241 = vld [vmem:[%s1 + $0x4a0] sm:$0xf]
    %v242 = vld [vmem:[%s1 + $0x4a4] sm:$0xff]
    %v243 = vld [vmem:[%s1 + $0x4ac] sm:$0xf]
    %v244 = vld [vmem:[%s1 + $0x4b0] sm:$0xff]
    %v245 = vld [vmem:[%s1 + $0x4b8] sm:$0xf]
    %v246 = vld [vmem:[%s1 + $0x4bc] sm:$0xff]
    %v247 = vld [vmem:[%s1 + $0x4c4] sm:$0xf]
    %v248 = vld [vmem:[%s1 + $0x4c8] sm:$0xff]
    %v249 = vld [vmem:[%s1 + $0x4d0] sm:$0xf]
    %v250 = vld [vmem:[%s1 + $0x4d4] sm:$0xff]
    %v251 = vld [vmem:[%s1 + $0x4dc] sm:$0xf]
    %v252 = vld [vmem:[%s1 + $0x4e0] sm:$0xff]
    %v253 = vld [vmem:[%s1 + $0x4e8] sm:$0xf]
    %v254 = vld [vmem:[%s1 + $0x4ec] sm:$0xff]
    %v255 = vld [vmem:[%s1 + $0x4f4] sm:$0xf]
    %v256 = vld [vmem:[%s1 + $0x4f8] sm:$0xff]
    %v257 = vld [vmem:[%s1 + $0x500] sm:$0xf]
    %v258 = vld [vmem:[%s1 + $0x504] sm:$0xff]
    %v259 = vld [vmem:[%s1 + $0x50c] sm:$0xf]
    %v260 = vld [vmem:[%s1 + $0x510] sm:$0xff]
    %v261 = vld [vmem:[%s1 + $0x518] sm:$0xf]
    %v262 = vld [vmem:[%s1 + $0x51c] sm:$0xff]
    %v263 = vld [vmem:[%s1 + $0x524] sm:$0xf]
    %v264 = vld [vmem:[%s1 + $0x528] sm:$0xff]
    %v265 = vld [vmem:[%s1 + $0x530] sm:$0xf]
    %v266 = vld [vmem:[%s1 + $0x534] sm:$0xff]
    %v267 = vld [vmem:[%s1 + $0x53c] sm:$0xf]
    %v268 = vld [vmem:[%s1 + $0x540] sm:$0xff]
    %v269 = vld [vmem:[%s1 + $0x548] sm:$0xf]
    %v270 = vld [vmem:[%s1 + $0x54c] sm:$0xff]
    %v271 = vld [vmem:[%s1 + $0x554] sm:$0xf]
    %v272 = vld [vmem:[%s1 + $0x558] sm:$0xff]
    %v273 = vld [vmem:[%s1 + $0x560] sm:$0xf]
    %v274 = vld [vmem:[%s1 + $0x564] sm:$0xff]
    %v275 = vld [vmem:[%s1 + $0x56c] sm:$0xf]
    %v276 = vld [vmem:[%s1 + $0x570] sm:$0xff]
    %v277 = vld [vmem:[%s1 + $0x578] sm:$0xf]
    %v278 = vld [vmem:[%s1 + $0x57c] sm:$0xff]
    %v279 = vld [vmem:[%s1 + $0x584] sm:$0xf]
    %v280 = vld [vmem:[%s1 + $0x588] sm:$0xff]
    %v281 = vld [vmem:[%s1 + $0x590] sm:$0xf]
    %v282 = vld [vmem:[%s1 + $0x594] sm:$0xff]
    %v283 = vld [vmem:[%s1 + $0x59c] sm:$0xf]
    %v284 = vld [vmem:[%s1 + $0x5a0] sm:$0xff]
    %v285 = vld [vmem:[%s1 + $0x5a8] sm:$0xf]
    %v286 = vld [vmem:[%s1 + $0x5ac] sm:$0xff]
    %v287 = vld [vmem:[%s1 + $0x5b4] sm:$0xf]
    %v288 = vld [vmem:[%s1 + $0x5b8] sm:$0xff]
    %v289 = vld [vmem:[%s1 + $0x5c0] sm:$0xf]
    %v290 = vld [vmem:[%s1 + $0x5c4] sm:$0xff]
    %v291 = vld [vmem:[%s1 + $0x5cc] sm:$0xf]
    %v292 = vld [vmem:[%s1 + $0x5d0] sm:$0xff]
    %v293 = vld [vmem:[%s1 + $0x5d8] sm:$0xf]
    %v294 = vld [vmem:[%s1 + $0x5dc] sm:$0xff]
    %v295 = vld [vmem:[%s1 + $0x5e4] sm:$0xf]
    %v296 = vld [vmem:[%s1 + $0x5e8] sm:$0xff]
    %v297 = vld [vmem:[%s1 + $0x5f0] sm:$0xf]
    %v298 = vld [vmem:[%s1 + $0x5f4] sm:$0xff]
    %v299 = vld [vmem:[%s1 + $0x5fc] sm:$0xf]
    %v300 = vld [vmem:[%s2] sm:$0x7]
    %v302 = vlaneseq
    %v303 = vshrl.u32 %v302, 7
    %v304 = vsub.s32 0, %v303
    %v305 = vrot.slane %v300, %v304
    %v306 = vlaneseq
    %v307 = vshrl.u32 %v306, 7
    %v308 = vsub.s32 1, %v307
    %v309 = vrot.slane %v300, %v308
    %v310 = vlaneseq
    %v311 = vshrl.u32 %v310, 7
    %v312 = vsub.s32 2, %v311
    %v313 = vrot.slane %v300, %v312
    %v573 = vunpack.c.l.b16 %v44
    %v574 = vunpack.c.h.b16 %v44
    %v575 = vunpack.c.l.b16 %v45
    %v576 = vunpack.c.l.b16 %v46
    %v577 = vunpack.c.h.b16 %v46
    %v578 = vunpack.c.l.b16 %v47
    %v579 = vunpack.c.l.b16 %v48
    %v580 = vunpack.c.h.b16 %v48
    %v581 = vunpack.c.l.b16 %v49
    %v582 = vunpack.c.l.b16 %v50
    %v583 = vunpack.c.h.b16 %v50
    %v584 = vunpack.c.l.b16 %v51
    %v585 = vunpack.c.l.b16 %v52
    %v586 = vunpack.c.h.b16 %v52
    %v587 = vunpack.c.l.b16 %v53
    %v588 = vunpack.c.l.b16 %v54
    %v589 = vunpack.c.h.b16 %v54
    %v590 = vunpack.c.l.b16 %v55
    %v591 = vunpack.c.l.b16 %v56
    %v592 = vunpack.c.h.b16 %v56
    %v593 = vunpack.c.l.b16 %v57
    %v594 = vunpack.c.l.b16 %v58
    %v595 = vunpack.c.h.b16 %v58
    %v596 = vunpack.c.l.b16 %v59
    %v597 = vunpack.c.l.b16 %v60
    %v598 = vunpack.c.h.b16 %v60
    %v599 = vunpack.c.l.b16 %v61
    %v600 = vunpack.c.l.b16 %v62
    %v601 = vunpack.c.h.b16 %v62
    %v602 = vunpack.c.l.b16 %v63
    %v603 = vunpack.c.l.b16 %v64
    %v604 = vunpack.c.h.b16 %v64
    %v605 = vunpack.c.l.b16 %v65
    %v606 = vunpack.c.l.b16 %v66
    %v607 = vunpack.c.h.b16 %v66
    %v608 = vunpack.c.l.b16 %v67
    %v609 = vunpack.c.l.b16 %v68
    %v610 = vunpack.c.h.b16 %v68
    %v611 = vunpack.c.l.b16 %v69
    %v612 = vunpack.c.l.b16 %v70
    %v613 = vunpack.c.h.b16 %v70
    %v614 = vunpack.c.l.b16 %v71
    %v615 = vunpack.c.l.b16 %v72
    %v616 = vunpack.c.h.b16 %v72
    %v617 = vunpack.c.l.b16 %v73
    %v618 = vunpack.c.l.b16 %v74
    %v619 = vunpack.c.h.b16 %v74
    %v620 = vunpack.c.l.b16 %v75
    %v621 = vunpack.c.l.b16 %v76
    %v622 = vunpack.c.h.b16 %v76
    %v623 = vunpack.c.l.b16 %v77
    %v624 = vunpack.c.l.b16 %v78
    %v625 = vunpack.c.h.b16 %v78
    %v626 = vunpack.c.l.b16 %v79
    %v627 = vunpack.c.l.b16 %v80
    %v628 = vunpack.c.h.b16 %v80
    %v629 = vunpack.c.l.b16 %v81
    %v630 = vunpack.c.l.b16 %v82
    %v631 = vunpack.c.h.b16 %v82
    %v632 = vunpack.c.l.b16 %v83
    %v633 = vunpack.c.l.b16 %v84
    %v634 = vunpack.c.h.b16 %v84
    %v635 = vunpack.c.l.b16 %v85
    %v636 = vunpack.c.l.b16 %v86
    %v637 = vunpack.c.h.b16 %v86
    %v638 = vunpack.c.l.b16 %v87
    %v639 = vunpack.c.l.b16 %v88
    %v640 = vunpack.c.h.b16 %v88
    %v641 = vunpack.c.l.b16 %v89
    %v642 = vunpack.c.l.b16 %v90
    %v643 = vunpack.c.h.b16 %v90
    %v644 = vunpack.c.l.b16 %v91
    %v645 = vunpack.c.l.b16 %v92
    %v646 = vunpack.c.h.b16 %v92
    %v647 = vunpack.c.l.b16 %v93
    %v648 = vunpack.c.l.b16 %v94
    %v649 = vunpack.c.h.b16 %v94
    %v650 = vunpack.c.l.b16 %v95
    %v651 = vunpack.c.l.b16 %v96
    %v652 = vunpack.c.h.b16 %v96
    %v653 = vunpack.c.l.b16 %v97
    %v654 = vunpack.c.l.b16 %v98
    %v655 = vunpack.c.h.b16 %v98
    %v656 = vunpack.c.l.b16 %v99
    %v657 = vunpack.c.l.b16 %v100
    %v658 = vunpack.c.h.b16 %v100
    %v659 = vunpack.c.l.b16 %v101
    %v660 = vunpack.c.l.b16 %v102
    %v661 = vunpack.c.h.b16 %v102
    %v662 = vunpack.c.l.b16 %v103
    %v663 = vunpack.c.l.b16 %v104
    %v664 = vunpack.c.h.b16 %v104
    %v665 = vunpack.c.l.b16 %v105
    %v666 = vunpack.c.l.b16 %v106
    %v667 = vunpack.c.h.b16 %v106
    %v668 = vunpack.c.l.b16 %v107
    %v669 = vunpack.c.l.b16 %v108
    %v670 = vunpack.c.h.b16 %v108
    %v671 = vunpack.c.l.b16 %v109
    %v672 = vunpack.c.l.b16 %v110
    %v673 = vunpack.c.h.b16 %v110
    %v674 = vunpack.c.l.b16 %v111
    %v675 = vunpack.c.l.b16 %v112
    %v676 = vunpack.c.h.b16 %v112
    %v677 = vunpack.c.l.b16 %v113
    %v678 = vunpack.c.l.b16 %v114
    %v679 = vunpack.c.h.b16 %v114
    %v680 = vunpack.c.l.b16 %v115
    %v681 = vunpack.c.l.b16 %v116
    %v682 = vunpack.c.h.b16 %v116
    %v683 = vunpack.c.l.b16 %v117
    %v684 = vunpack.c.l.b16 %v118
    %v685 = vunpack.c.h.b16 %v118
    %v686 = vunpack.c.l.b16 %v119
    %v687 = vunpack.c.l.b16 %v120
    %v688 = vunpack.c.h.b16 %v120
    %v689 = vunpack.c.l.b16 %v121
    %v690 = vunpack.c.l.b16 %v122
    %v691 = vunpack.c.h.b16 %v122
    %v692 = vunpack.c.l.b16 %v123
    %v693 = vunpack.c.l.b16 %v124
    %v694 = vunpack.c.h.b16 %v124
    %v695 = vunpack.c.l.b16 %v125
    %v696 = vunpack.c.l.b16 %v126
    %v697 = vunpack.c.h.b16 %v126
    %v698 = vunpack.c.l.b16 %v127
    %v699 = vunpack.c.l.b16 %v128
    %v700 = vunpack.c.h.b16 %v128
    %v701 = vunpack.c.l.b16 %v129
    %v702 = vunpack.c.l.b16 %v130
    %v703 = vunpack.c.h.b16 %v130
    %v704 = vunpack.c.l.b16 %v131
    %v705 = vunpack.c.l.b16 %v132
    %v706 = vunpack.c.h.b16 %v132
    %v707 = vunpack.c.l.b16 %v133
    %v708 = vunpack.c.l.b16 %v134
    %v709 = vunpack.c.h.b16 %v134
    %v710 = vunpack.c.l.b16 %v135
    %v711 = vunpack.c.l.b16 %v136
    %v712 = vunpack.c.h.b16 %v136
    %v713 = vunpack.c.l.b16 %v137
    %v714 = vunpack.c.l.b16 %v138
    %v715 = vunpack.c.h.b16 %v138
    %v716 = vunpack.c.l.b16 %v139
    %v717 = vunpack.c.l.b16 %v140
    %v718 = vunpack.c.h.b16 %v140
    %v719 = vunpack.c.l.b16 %v141
    %v720 = vunpack.c.l.b16 %v142
    %v721 = vunpack.c.h.b16 %v142
    %v722 = vunpack.c.l.b16 %v143
    %v723 = vunpack.c.l.b16 %v144
    %v724 = vunpack.c.h.b16 %v144
    %v725 = vunpack.c.l.b16 %v145
    %v726 = vunpack.c.l.b16 %v146
    %v727 = vunpack.c.h.b16 %v146
    %v728 = vunpack.c.l.b16 %v147
    %v729 = vunpack.c.l.b16 %v148
    %v730 = vunpack.c.h.b16 %v148
    %v731 = vunpack.c.l.b16 %v149
    %v732 = vunpack.c.l.b16 %v150
    %v733 = vunpack.c.h.b16 %v150
    %v734 = vunpack.c.l.b16 %v151
    %v735 = vunpack.c.l.b16 %v152
    %v736 = vunpack.c.h.b16 %v152
    %v737 = vunpack.c.l.b16 %v153
    %v738 = vunpack.c.l.b16 %v154
    %v739 = vunpack.c.h.b16 %v154
    %v740 = vunpack.c.l.b16 %v155
    %v741 = vunpack.c.l.b16 %v156
    %v742 = vunpack.c.h.b16 %v156
    %v743 = vunpack.c.l.b16 %v157
    %v744 = vunpack.c.l.b16 %v158
    %v745 = vunpack.c.h.b16 %v158
    %v746 = vunpack.c.l.b16 %v159
    %v747 = vunpack.c.l.b16 %v160
    %v748 = vunpack.c.h.b16 %v160
    %v749 = vunpack.c.l.b16 %v161
    %v750 = vunpack.c.l.b16 %v162
    %v751 = vunpack.c.h.b16 %v162
    %v752 = vunpack.c.l.b16 %v163
    %v753 = vunpack.c.l.b16 %v164
    %v754 = vunpack.c.h.b16 %v164
    %v755 = vunpack.c.l.b16 %v165
    %v756 = vunpack.c.l.b16 %v166
    %v757 = vunpack.c.h.b16 %v166
    %v758 = vunpack.c.l.b16 %v167
    %v759 = vunpack.c.l.b16 %v168
    %v760 = vunpack.c.h.b16 %v168
    %v761 = vunpack.c.l.b16 %v169
    %v762 = vunpack.c.l.b16 %v170
    %v763 = vunpack.c.h.b16 %v170
    %v764 = vunpack.c.l.b16 %v171
    %v765 = vunpack.c.l.b16 %v172
    %v766 = vunpack.c.h.b16 %v172
    %v767 = vunpack.c.l.b16 %v173
    %v768 = vunpack.c.l.b16 %v174
    %v769 = vunpack.c.h.b16 %v174
    %v770 = vunpack.c.l.b16 %v175
    %v771 = vunpack.c.l.b16 %v176
    %v772 = vunpack.c.h.b16 %v176
    %v773 = vunpack.c.l.b16 %v177
    %v774 = vunpack.c.l.b16 %v178
    %v775 = vunpack.c.h.b16 %v178
    %v776 = vunpack.c.l.b16 %v179
    %v777 = vunpack.c.l.b16 %v180
    %v778 = vunpack.c.h.b16 %v180
    %v779 = vunpack.c.l.b16 %v181
    %v780 = vunpack.c.l.b16 %v182
    %v781 = vunpack.c.h.b16 %v182
    %v782 = vunpack.c.l.b16 %v183
    %v783 = vunpack.c.l.b16 %v184
    %v784 = vunpack.c.h.b16 %v184
    %v785 = vunpack.c.l.b16 %v185
    %v786 = vunpack.c.l.b16 %v186
    %v787 = vunpack.c.h.b16 %v186
    %v788 = vunpack.c.l.b16 %v187
    %v789 = vunpack.c.l.b16 %v188
    %v790 = vunpack.c.h.b16 %v188
    %v791 = vunpack.c.l.b16 %v189
    %v792 = vunpack.c.l.b16 %v190
    %v793 = vunpack.c.h.b16 %v190
    %v794 = vunpack.c.l.b16 %v191
    %v795 = vunpack.c.l.b16 %v192
    %v796 = vunpack.c.h.b16 %v192
    %v797 = vunpack.c.l.b16 %v193
    %v798 = vunpack.c.l.b16 %v194
    %v799 = vunpack.c.h.b16 %v194
    %v800 = vunpack.c.l.b16 %v195
    %v801 = vunpack.c.l.b16 %v196
    %v802 = vunpack.c.h.b16 %v196
    %v803 = vunpack.c.l.b16 %v197
    %v804 = vunpack.c.l.b16 %v198
    %v805 = vunpack.c.h.b16 %v198
    %v806 = vunpack.c.l.b16 %v199
    %v807 = vunpack.c.l.b16 %v200
    %v808 = vunpack.c.h.b16 %v200
    %v809 = vunpack.c.l.b16 %v201
    %v810 = vunpack.c.l.b16 %v202
    %v811 = vunpack.c.h.b16 %v202
    %v812 = vunpack.c.l.b16 %v203
    %v813 = vunpack.c.l.b16 %v204
    %v814 = vunpack.c.h.b16 %v204
    %v815 = vunpack.c.l.b16 %v205
    %v816 = vunpack.c.l.b16 %v206
    %v817 = vunpack.c.h.b16 %v206
    %v818 = vunpack.c.l.b16 %v207
    %v819 = vunpack.c.l.b16 %v208
    %v820 = vunpack.c.h.b16 %v208
    %v821 = vunpack.c.l.b16 %v209
    %v822 = vunpack.c.l.b16 %v210
    %v823 = vunpack.c.h.b16 %v210
    %v824 = vunpack.c.l.b16 %v211
    %v825 = vunpack.c.l.b16 %v212
    %v826 = vunpack.c.h.b16 %v212
    %v827 = vunpack.c.l.b16 %v213
    %v828 = vunpack.c.l.b16 %v214
    %v829 = vunpack.c.h.b16 %v214
    %v830 = vunpack.c.l.b16 %v215
    %v831 = vunpack.c.l.b16 %v216
    %v832 = vunpack.c.h.b16 %v216
    %v833 = vunpack.c.l.b16 %v217
    %v834 = vunpack.c.l.b16 %v218
    %v835 = vunpack.c.h.b16 %v218
    %v836 = vunpack.c.l.b16 %v219
    %v837 = vunpack.c.l.b16 %v220
    %v838 = vunpack.c.h.b16 %v220
    %v839 = vunpack.c.l.b16 %v221
    %v840 = vunpack.c.l.b16 %v222
    %v841 = vunpack.c.h.b16 %v222
    %v842 = vunpack.c.l.b16 %v223
    %v843 = vunpack.c.l.b16 %v224
    %v844 = vunpack.c.h.b16 %v224
    %v845 = vunpack.c.l.b16 %v225
    %v846 = vunpack.c.l.b16 %v226
    %v847 = vunpack.c.h.b16 %v226
    %v848 = vunpack.c.l.b16 %v227
    %v849 = vunpack.c.l.b16 %v228
    %v850 = vunpack.c.h.b16 %v228
    %v851 = vunpack.c.l.b16 %v229
    %v852 = vunpack.c.l.b16 %v230
    %v853 = vunpack.c.h.b16 %v230
    %v854 = vunpack.c.l.b16 %v231
    %v855 = vunpack.c.l.b16 %v232
    %v856 = vunpack.c.h.b16 %v232
    %v857 = vunpack.c.l.b16 %v233
    %v858 = vunpack.c.l.b16 %v234
    %v859 = vunpack.c.h.b16 %v234
    %v860 = vunpack.c.l.b16 %v235
    %v861 = vunpack.c.l.b16 %v236
    %v862 = vunpack.c.h.b16 %v236
    %v863 = vunpack.c.l.b16 %v237
    %v864 = vunpack.c.l.b16 %v238
    %v865 = vunpack.c.h.b16 %v238
    %v866 = vunpack.c.l.b16 %v239
    %v867 = vunpack.c.l.b16 %v240
    %v868 = vunpack.c.h.b16 %v240
    %v869 = vunpack.c.l.b16 %v241
    %v870 = vunpack.c.l.b16 %v242
    %v871 = vunpack.c.h.b16 %v242
    %v872 = vunpack.c.l.b16 %v243
    %v873 = vunpack.c.l.b16 %v244
    %v874 = vunpack.c.h.b16 %v244
    %v875 = vunpack.c.l.b16 %v245
    %v876 = vunpack.c.l.b16 %v246
    %v877 = vunpack.c.h.b16 %v246
    %v878 = vunpack.c.l.b16 %v247
    %v879 = vunpack.c.l.b16 %v248
    %v880 = vunpack.c.h.b16 %v248
    %v881 = vunpack.c.l.b16 %v249
    %v882 = vunpack.c.l.b16 %v250
    %v883 = vunpack.c.h.b16 %v250
    %v884 = vunpack.c.l.b16 %v251
    %v885 = vunpack.c.l.b16 %v252
    %v886 = vunpack.c.h.b16 %v252
    %v887 = vunpack.c.l.b16 %v253
    %v888 = vunpack.c.l.b16 %v254
    %v889 = vunpack.c.h.b16 %v254
    %v890 = vunpack.c.l.b16 %v255
    %v891 = vunpack.c.l.b16 %v256
    %v892 = vunpack.c.h.b16 %v256
    %v893 = vunpack.c.l.b16 %v257
    %v894 = vunpack.c.l.b16 %v258
    %v895 = vunpack.c.h.b16 %v258
    %v896 = vunpack.c.l.b16 %v259
    %v897 = vunpack.c.l.b16 %v260
    %v898 = vunpack.c.h.b16 %v260
    %v899 = vunpack.c.l.b16 %v261
    %v900 = vunpack.c.l.b16 %v262
    %v901 = vunpack.c.h.b16 %v262
    %v902 = vunpack.c.l.b16 %v263
    %v903 = vunpack.c.l.b16 %v264
    %v904 = vunpack.c.h.b16 %v264
    %v905 = vunpack.c.l.b16 %v265
    %v906 = vunpack.c.l.b16 %v266
    %v907 = vunpack.c.h.b16 %v266
    %v908 = vunpack.c.l.b16 %v267
    %v909 = vunpack.c.l.b16 %v268
    %v910 = vunpack.c.h.b16 %v268
    %v911 = vunpack.c.l.b16 %v269
    %v912 = vunpack.c.l.b16 %v270
    %v913 = vunpack.c.h.b16 %v270
    %v914 = vunpack.c.l.b16 %v271
    %v915 = vunpack.c.l.b16 %v272
    %v916 = vunpack.c.h.b16 %v272
    %v917 = vunpack.c.l.b16 %v273
    %v918 = vunpack.c.l.b16 %v274
    %v919 = vunpack.c.h.b16 %v274
    %v920 = vunpack.c.l.b16 %v275
    %v921 = vunpack.c.l.b16 %v276
    %v922 = vunpack.c.h.b16 %v276
    %v923 = vunpack.c.l.b16 %v277
    %v924 = vunpack.c.l.b16 %v278
    %v925 = vunpack.c.h.b16 %v278
    %v926 = vunpack.c.l.b16 %v279
    %v927 = vunpack.c.l.b16 %v280
    %v928 = vunpack.c.h.b16 %v280
    %v929 = vunpack.c.l.b16 %v281
    %v930 = vunpack.c.l.b16 %v282
    %v931 = vunpack.c.h.b16 %v282
    %v932 = vunpack.c.l.b16 %v283
    %v933 = vunpack.c.l.b16 %v284
    %v934 = vunpack.c.h.b16 %v284
    %v935 = vunpack.c.l.b16 %v285
    %v936 = vunpack.c.l.b16 %v286
    %v937 = vunpack.c.h.b16 %v286
    %v938 = vunpack.c.l.b16 %v287
    %v939 = vunpack.c.l.b16 %v288
    %v940 = vunpack.c.h.b16 %v288
    %v941 = vunpack.c.l.b16 %v289
    %v942 = vunpack.c.l.b16 %v290
    %v943 = vunpack.c.h.b16 %v290
    %v944 = vunpack.c.l.b16 %v291
    %v945 = vunpack.c.l.b16 %v292
    %v946 = vunpack.c.h.b16 %v292
    %v947 = vunpack.c.l.b16 %v293
    %v948 = vunpack.c.l.b16 %v294
    %v949 = vunpack.c.h.b16 %v294
    %v950 = vunpack.c.l.b16 %v295
    %v951 = vunpack.c.l.b16 %v296
    %v952 = vunpack.c.h.b16 %v296
    %v953 = vunpack.c.l.b16 %v297
    %v954 = vunpack.c.l.b16 %v298
    %v955 = vunpack.c.h.b16 %v298
    %v956 = vunpack.c.l.b16 %v299
    %v957 = vpack.c.b16 %v576, %v573
    %v958 = vpack.c.b16 %v577, %v574
    %v959 = vpack.c.b16 %v578, %v575
    %v960 = vpack.c.b16 %v582, %v579
    %v961 = vpack.c.b16 %v583, %v580
    %v962 = vpack.c.b16 %v584, %v581
    %v963 = vpack.c.b16 %v588, %v585
    %v964 = vpack.c.b16 %v589, %v586
    %v965 = vpack.c.b16 %v590, %v587
    %v966 = vpack.c.b16 %v594, %v591
    %v967 = vpack.c.b16 %v595, %v592
    %v968 = vpack.c.b16 %v596, %v593
    %v969 = vpack.c.b16 %v600, %v597
    %v970 = vpack.c.b16 %v601, %v598
    %v971 = vpack.c.b16 %v602, %v599
    %v972 = vpack.c.b16 %v606, %v603
    %v973 = vpack.c.b16 %v607, %v604
    %v974 = vpack.c.b16 %v608, %v605
    %v975 = vpack.c.b16 %v612, %v609
    %v976 = vpack.c.b16 %v613, %v610
    %v977 = vpack.c.b16 %v614, %v611
    %v978 = vpack.c.b16 %v618, %v615
    %v979 = vpack.c.b16 %v619, %v616
    %v980 = vpack.c.b16 %v620, %v617
    %v981 = vpack.c.b16 %v624, %v621
    %v982 = vpack.c.b16 %v625, %v622
    %v983 = vpack.c.b16 %v626, %v623
    %v984 = vpack.c.b16 %v630, %v627
    %v985 = vpack.c.b16 %v631, %v628
    %v986 = vpack.c.b16 %v632, %v629
    %v987 = vpack.c.b16 %v636, %v633
    %v988 = vpack.c.b16 %v637, %v634
    %v989 = vpack.c.b16 %v638, %v635
    %v990 = vpack.c.b16 %v642, %v639
    %v991 = vpack.c.b16 %v643, %v640
    %v992 = vpack.c.b16 %v644, %v641
    %v993 = vpack.c.b16 %v648, %v645
    %v994 = vpack.c.b16 %v649, %v646
    %v995 = vpack.c.b16 %v650, %v647
    %v996 = vpack.c.b16 %v654, %v651
    %v997 = vpack.c.b16 %v655, %v652
    %v998 = vpack.c.b16 %v656, %v653
    %v999 = vpack.c.b16 %v660, %v657
    %v1000 = vpack.c.b16 %v661, %v658
    %v1001 = vpack.c.b16 %v662, %v659
    %v1002 = vpack.c.b16 %v666, %v663
    %v1003 = vpack.c.b16 %v667, %v664
    %v1004 = vpack.c.b16 %v668, %v665
    %v1005 = vpack.c.b16 %v672, %v669
    %v1006 = vpack.c.b16 %v673, %v670
    %v1007 = vpack.c.b16 %v674, %v671
    %v1008 = vpack.c.b16 %v678, %v675
    %v1009 = vpack.c.b16 %v679, %v676
    %v1010 = vpack.c.b16 %v680, %v677
    %v1011 = vpack.c.b16 %v684, %v681
    %v1012 = vpack.c.b16 %v685, %v682
    %v1013 = vpack.c.b16 %v686, %v683
    %v1014 = vpack.c.b16 %v690, %v687
    %v1015 = vpack.c.b16 %v691, %v688
    %v1016 = vpack.c.b16 %v692, %v689
    %v1017 = vpack.c.b16 %v696, %v693
    %v1018 = vpack.c.b16 %v697, %v694
    %v1019 = vpack.c.b16 %v698, %v695
    %v1020 = vpack.c.b16 %v702, %v699
    %v1021 = vpack.c.b16 %v703, %v700
    %v1022 = vpack.c.b16 %v704, %v701
    %v1023 = vpack.c.b16 %v708, %v705
    %v1024 = vpack.c.b16 %v709, %v706
    %v1025 = vpack.c.b16 %v710, %v707
    %v1026 = vpack.c.b16 %v714, %v711
    %v1027 = vpack.c.b16 %v715, %v712
    %v1028 = vpack.c.b16 %v716, %v713
    %v1029 = vpack.c.b16 %v720, %v717
    %v1030 = vpack.c.b16 %v721, %v718
    %v1031 = vpack.c.b16 %v722, %v719
    %v1032 = vpack.c.b16 %v726, %v723
    %v1033 = vpack.c.b16 %v727, %v724
    %v1034 = vpack.c.b16 %v728, %v725
    %v1035 = vpack.c.b16 %v732, %v729
    %v1036 = vpack.c.b16 %v733, %v730
    %v1037 = vpack.c.b16 %v734, %v731
    %v1038 = vpack.c.b16 %v738, %v735
    %v1039 = vpack.c.b16 %v739, %v736
    %v1040 = vpack.c.b16 %v740, %v737
    %v1041 = vpack.c.b16 %v744, %v741
    %v1042 = vpack.c.b16 %v745, %v742
    %v1043 = vpack.c.b16 %v746, %v743
    %v1044 = vpack.c.b16 %v750, %v747
    %v1045 = vpack.c.b16 %v751, %v748
    %v1046 = vpack.c.b16 %v752, %v749
    %v1047 = vpack.c.b16 %v756, %v753
    %v1048 = vpack.c.b16 %v757, %v754
    %v1049 = vpack.c.b16 %v758, %v755
    %v1050 = vpack.c.b16 %v762, %v759
    %v1051 = vpack.c.b16 %v763, %v760
    %v1052 = vpack.c.b16 %v764, %v761
    %v1053 = vpack.c.b16 %v768, %v765
    %v1054 = vpack.c.b16 %v769, %v766
    %v1055 = vpack.c.b16 %v770, %v767
    %v1056 = vpack.c.b16 %v774, %v771
    %v1057 = vpack.c.b16 %v775, %v772
    %v1058 = vpack.c.b16 %v776, %v773
    %v1059 = vpack.c.b16 %v780, %v777
    %v1060 = vpack.c.b16 %v781, %v778
    %v1061 = vpack.c.b16 %v782, %v779
    %v1062 = vpack.c.b16 %v786, %v783
    %v1063 = vpack.c.b16 %v787, %v784
    %v1064 = vpack.c.b16 %v788, %v785
    %v1065 = vpack.c.b16 %v792, %v789
    %v1066 = vpack.c.b16 %v793, %v790
    %v1067 = vpack.c.b16 %v794, %v791
    %v1068 = vpack.c.b16 %v798, %v795
    %v1069 = vpack.c.b16 %v799, %v796
    %v1070 = vpack.c.b16 %v800, %v797
    %v1071 = vpack.c.b16 %v804, %v801
    %v1072 = vpack.c.b16 %v805, %v802
    %v1073 = vpack.c.b16 %v806, %v803
    %v1074 = vpack.c.b16 %v810, %v807
    %v1075 = vpack.c.b16 %v811, %v808
    %v1076 = vpack.c.b16 %v812, %v809
    %v1077 = vpack.c.b16 %v816, %v813
    %v1078 = vpack.c.b16 %v817, %v814
    %v1079 = vpack.c.b16 %v818, %v815
    %v1080 = vpack.c.b16 %v822, %v819
    %v1081 = vpack.c.b16 %v823, %v820
    %v1082 = vpack.c.b16 %v824, %v821
    %v1083 = vpack.c.b16 %v828, %v825
    %v1084 = vpack.c.b16 %v829, %v826
    %v1085 = vpack.c.b16 %v830, %v827
    %v1086 = vpack.c.b16 %v834, %v831
    %v1087 = vpack.c.b16 %v835, %v832
    %v1088 = vpack.c.b16 %v836, %v833
    %v1089 = vpack.c.b16 %v840, %v837
    %v1090 = vpack.c.b16 %v841, %v838
    %v1091 = vpack.c.b16 %v842, %v839
    %v1092 = vpack.c.b16 %v846, %v843
    %v1093 = vpack.c.b16 %v847, %v844
    %v1094 = vpack.c.b16 %v848, %v845
    %v1095 = vpack.c.b16 %v852, %v849
    %v1096 = vpack.c.b16 %v853, %v850
    %v1097 = vpack.c.b16 %v854, %v851
    %v1098 = vpack.c.b16 %v858, %v855
    %v1099 = vpack.c.b16 %v859, %v856
    %v1100 = vpack.c.b16 %v860, %v857
    %v1101 = vpack.c.b16 %v864, %v861
    %v1102 = vpack.c.b16 %v865, %v862
    %v1103 = vpack.c.b16 %v866, %v863
    %v1104 = vpack.c.b16 %v870, %v867
    %v1105 = vpack.c.b16 %v871, %v868
    %v1106 = vpack.c.b16 %v872, %v869
    %v1107 = vpack.c.b16 %v876, %v873
    %v1108 = vpack.c.b16 %v877, %v874
    %v1109 = vpack.c.b16 %v878, %v875
    %v1110 = vpack.c.b16 %v882, %v879
    %v1111 = vpack.c.b16 %v883, %v880
    %v1112 = vpack.c.b16 %v884, %v881
    %v1113 = vpack.c.b16 %v888, %v885
    %v1114 = vpack.c.b16 %v889, %v886
    %v1115 = vpack.c.b16 %v890, %v887
    %v1116 = vpack.c.b16 %v894, %v891
    %v1117 = vpack.c.b16 %v895, %v892
    %v1118 = vpack.c.b16 %v896, %v893
    %v1119 = vpack.c.b16 %v900, %v897
    %v1120 = vpack.c.b16 %v901, %v898
    %v1121 = vpack.c.b16 %v902, %v899
    %v1122 = vpack.c.b16 %v906, %v903
    %v1123 = vpack.c.b16 %v907, %v904
    %v1124 = vpack.c.b16 %v908, %v905
    %v1125 = vpack.c.b16 %v912, %v909
    %v1126 = vpack.c.b16 %v913, %v910
    %v1127 = vpack.c.b16 %v914, %v911
    %v1128 = vpack.c.b16 %v918, %v915
    %v1129 = vpack.c.b16 %v919, %v916
    %v1130 = vpack.c.b16 %v920, %v917
    %v1131 = vpack.c.b16 %v924, %v921
    %v1132 = vpack.c.b16 %v925, %v922
    %v1133 = vpack.c.b16 %v926, %v923
    %v1134 = vpack.c.b16 %v930, %v927
    %v1135 = vpack.c.b16 %v931, %v928
    %v1136 = vpack.c.b16 %v932, %v929
    %v1137 = vpack.c.b16 %v936, %v933
    %v1138 = vpack.c.b16 %v937, %v934
    %v1139 = vpack.c.b16 %v938, %v935
    %v1140 = vpack.c.b16 %v942, %v939
    %v1141 = vpack.c.b16 %v943, %v940
    %v1142 = vpack.c.b16 %v944, %v941
    %v1143 = vpack.c.b16 %v948, %v945
    %v1144 = vpack.c.b16 %v949, %v946
    %v1145 = vpack.c.b16 %v950, %v947
    %v1146 = vpack.c.b16 %v954, %v951
    %v1147 = vpack.c.b16 %v955, %v952
    %v1148 = vpack.c.b16 %v956, %v953
    %1341 = vmatprep.subr.bf16.mxu0 %v979
    %1342 = vmatpush1.bf16.msra.mxu0 %v978
    %1343 = vmatprep.subr.bf16.mxu0 %v976
    %1344 = vmatpush1.bf16.msra.mxu0 %v975
    %1345 = vmatprep.subr.bf16.mxu0 %v973
    %1346 = vmatpush1.bf16.msra.mxu0 %v972
    %1347 = vmatprep.subr.bf16.mxu0 %v970
    %1348 = vmatpush1.bf16.msra.mxu0 %v969
    %1349 = vmatprep.subr.bf16.mxu0 %v967
    %1350 = vmatpush1.bf16.msra.mxu0 %v966
    %1351 = vmatprep.subr.bf16.mxu0 %v964
    %1352 = vmatpush1.bf16.msra.mxu0 %v963
    %1353 = vmatprep.subr.bf16.mxu0 %v961
    %1354 = vmatpush1.bf16.msra.mxu0 %v960
    %1355 = vmatprep.subr.bf16.mxu0 %v958
    %1356 = vmatpush1.bf16.msra.mxu0 %v957
    %1357 = vmatprep.subr.bf16.mxu0 %v1003
    %1358 = vmatpush2.bf16.msra.mxu0 %v1002
    %1359 = vmatprep.subr.bf16.mxu0 %v1000
    %1360 = vmatpush2.bf16.msra.mxu0 %v999
    %1361 = vmatprep.subr.bf16.mxu0 %v997
    %1362 = vmatpush2.bf16.msra.mxu0 %v996
    %1363 = vmatprep.subr.bf16.mxu0 %v994
    %1364 = vmatpush2.bf16.msra.mxu0 %v993
    %1365 = vmatprep.subr.bf16.mxu0 %v991
    %1366 = vmatpush2.bf16.msra.mxu0 %v990
    %1367 = vmatprep.subr.bf16.mxu0 %v988
    %1368 = vmatpush2.bf16.msra.mxu0 %v987
    %1369 = vmatprep.subr.bf16.mxu0 %v985
    %1370 = vmatpush2.bf16.msra.mxu0 %v984
    %1371 = vmatprep.subr.bf16.mxu0 %v982
    %1372 = vmatpush2.bf16.msra.mxu0 %v981
    %1373 = vmatprep.mubr.bf16.mxu0 %v37
    %1374 = vmatmul.mubr.bf16.gmra.mxu0 %v36
    %v1375 = vpop.f32.mrf.mxu0
    %v1376 = vadd.f32 %v305, %v1375
    %v1377 = vpop.f32.mrf.mxu0
    %v1378 = vadd.f32 %v309, %v1377
    %v1379 = vpop.f32.mrf.mxu0
    %v1380 = vpop.f32.mrf.mxu0
    %1381 = vdwg.mxu0
    %1382 = vmatprep.subr.bf16.mxu0 %v1027
    %1383 = vmatpush1.bf16.msra.mxu0 %v1026
    %1384 = vmatprep.subr.bf16.mxu0 %v1024
    %1385 = vmatpush1.bf16.msra.mxu0 %v1023
    %1386 = vmatprep.subr.bf16.mxu0 %v1021
    %1387 = vmatpush1.bf16.msra.mxu0 %v1020
    %1388 = vmatprep.subr.bf16.mxu0 %v1018
    %1389 = vmatpush1.bf16.msra.mxu0 %v1017
    %1390 = vmatprep.subr.bf16.mxu0 %v1015
    %1391 = vmatpush1.bf16.msra.mxu0 %v1014
    %1392 = vmatprep.subr.bf16.mxu0 %v1012
    %1393 = vmatpush1.bf16.msra.mxu0 %v1011
    %1394 = vmatprep.subr.bf16.mxu0 %v1009
    %1395 = vmatpush1.bf16.msra.mxu0 %v1008
    %1396 = vmatprep.subr.bf16.mxu0 %v1006
    %1397 = vmatpush1.bf16.msra.mxu0 %v1005
    %1398 = vmatprep.subr.bf16.mxu0 %v1051
    %1399 = vmatpush2.bf16.msra.mxu0 %v1050
    %1400 = vmatprep.subr.bf16.mxu0 %v1048
    %1401 = vmatpush2.bf16.msra.mxu0 %v1047
    %1402 = vmatprep.subr.bf16.mxu0 %v1045
    %1403 = vmatpush2.bf16.msra.mxu0 %v1044
    %1404 = vmatprep.subr.bf16.mxu0 %v1042
    %1405 = vmatpush2.bf16.msra.mxu0 %v1041
    %1406 = vmatprep.subr.bf16.mxu0 %v1039
    %1407 = vmatpush2.bf16.msra.mxu0 %v1038
    %1408 = vmatprep.subr.bf16.mxu0 %v1036
    %1409 = vmatpush2.bf16.msra.mxu0 %v1035
    %1410 = vmatprep.subr.bf16.mxu0 %v1033
    %1411 = vmatpush2.bf16.msra.mxu0 %v1032
    %1412 = vmatprep.subr.bf16.mxu0 %v1030
    %1413 = vmatpush2.bf16.msra.mxu0 %v1029
    %1414 = vmatprep.mubr.bf16.mxu0 %v39
    %1415 = vmatmul.mubr.bf16.gmra.mxu0 %v38
    %v1416 = vpop.f32.mrf.mxu0
    %v1417 = vadd.f32 %v1376, %v1416
    %v1418 = vpop.f32.mrf.mxu0
    %v1419 = vadd.f32 %v1378, %v1418
    %v1420 = vpop.f32.mrf.mxu0
    %v1421 = vpop.f32.mrf.mxu0
    %1422 = vdwg.mxu0
    %1423 = vmatprep.subr.bf16.mxu0 %v1075
    %1424 = vmatpush1.bf16.msra.mxu0 %v1074
    %1425 = vmatprep.subr.bf16.mxu0 %v1072
    %1426 = vmatpush1.bf16.msra.mxu0 %v1071
    %1427 = vmatprep.subr.bf16.mxu0 %v1069
    %1428 = vmatpush1.bf16.msra.mxu0 %v1068
    %1429 = vmatprep.subr.bf16.mxu0 %v1066
    %1430 = vmatpush1.bf16.msra.mxu0 %v1065
    %1431 = vmatprep.subr.bf16.mxu0 %v1063
    %1432 = vmatpush1.bf16.msra.mxu0 %v1062
    %1433 = vmatprep.subr.bf16.mxu0 %v1060
    %1434 = vmatpush1.bf16.msra.mxu0 %v1059
    %1435 = vmatprep.subr.bf16.mxu0 %v1057
    %1436 = vmatpush1.bf16.msra.mxu0 %v1056
    %1437 = vmatprep.subr.bf16.mxu0 %v1054
    %1438 = vmatpush1.bf16.msra.mxu0 %v1053
    %1439 = vmatprep.subr.bf16.mxu0 %v1099
    %1440 = vmatpush2.bf16.msra.mxu0 %v1098
    %1441 = vmatprep.subr.bf16.mxu0 %v1096
    %1442 = vmatpush2.bf16.msra.mxu0 %v1095
    %1443 = vmatprep.subr.bf16.mxu0 %v1093
    %1444 = vmatpush2.bf16.msra.mxu0 %v1092
    %1445 = vmatprep.subr.bf16.mxu0 %v1090
    %1446 = vmatpush2.bf16.msra.mxu0 %v1089
    %1447 = vmatprep.subr.bf16.mxu0 %v1087
    %1448 = vmatpush2.bf16.msra.mxu0 %v1086
    %1449 = vmatprep.subr.bf16.mxu0 %v1084
    %1450 = vmatpush2.bf16.msra.mxu0 %v1083
    %1451 = vmatprep.subr.bf16.mxu0 %v1081
    %1452 = vmatpush2.bf16.msra.mxu0 %v1080
    %1453 = vmatprep.subr.bf16.mxu0 %v1078
    %1454 = vmatpush2.bf16.msra.mxu0 %v1077
    %1455 = vmatprep.mubr.bf16.mxu0 %v41
    %1456 = vmatmul.mubr.bf16.gmra.mxu0 %v40
    %v1457 = vpop.f32.mrf.mxu0
    %v1458 = vadd.f32 %v1417, %v1457
    %v1459 = vpop.f32.mrf.mxu0
    %v1460 = vadd.f32 %v1419, %v1459
    %v1461 = vpop.f32.mrf.mxu0
    %v1462 = vpop.f32.mrf.mxu0
    %1463 = vdwg.mxu0
    %1464 = vmatprep.subr.bf16.mxu0 %v1123
    %1465 = vmatpush1.bf16.msra.mxu0 %v1122
    %1466 = vmatprep.subr.bf16.mxu0 %v1120
    %1467 = vmatpush1.bf16.msra.mxu0 %v1119
    %1468 = vmatprep.subr.bf16.mxu0 %v1117
    %1469 = vmatpush1.bf16.msra.mxu0 %v1116
    %1470 = vmatprep.subr.bf16.mxu0 %v1114
    %1471 = vmatpush1.bf16.msra.mxu0 %v1113
    %1472 = vmatprep.subr.bf16.mxu0 %v1111
    %1473 = vmatpush1.bf16.msra.mxu0 %v1110
    %1474 = vmatprep.subr.bf16.mxu0 %v1108
    %1475 = vmatpush1.bf16.msra.mxu0 %v1107
    %1476 = vmatprep.subr.bf16.mxu0 %v1105
    %1477 = vmatpush1.bf16.msra.mxu0 %v1104
    %1478 = vmatprep.subr.bf16.mxu0 %v1102
    %1479 = vmatpush1.bf16.msra.mxu0 %v1101
    %1480 = vmatprep.subr.bf16.mxu0 %v1147
    %1481 = vmatpush2.bf16.msra.mxu0 %v1146
    %1482 = vmatprep.subr.bf16.mxu0 %v1144
    %1483 = vmatpush2.bf16.msra.mxu0 %v1143
    %1484 = vmatprep.subr.bf16.mxu0 %v1141
    %1485 = vmatpush2.bf16.msra.mxu0 %v1140
    %1486 = vmatprep.subr.bf16.mxu0 %v1138
    %1487 = vmatpush2.bf16.msra.mxu0 %v1137
    %1488 = vmatprep.subr.bf16.mxu0 %v1135
    %1489 = vmatpush2.bf16.msra.mxu0 %v1134
    %1490 = vmatprep.subr.bf16.mxu0 %v1132
    %1491 = vmatpush2.bf16.msra.mxu0 %v1131
    %1492 = vmatprep.subr.bf16.mxu0 %v1129
    %1493 = vmatpush2.bf16.msra.mxu0 %v1128
    %1494 = vmatprep.subr.bf16.mxu0 %v1126
    %1495 = vmatpush2.bf16.msra.mxu0 %v1125
    %1496 = vmatprep.mubr.bf16.mxu0 %v43
    %1497 = vmatmul.mubr.bf16.gmra.mxu0 %v42
    %v1498 = vpop.f32.mrf.mxu0
    %v1499 = vadd.f32 %v1458, %v1498
    %v1500 = vpop.f32.mrf.mxu0
    %v1501 = vadd.f32 %v1460, %v1500
    %v1502 = vpop.f32.mrf.mxu0
    %v1503 = vpop.f32.mrf.mxu0
    %1504 = vdwg.mxu0
    %1505 = vmatprep.subr.bf16.mxu0 0
    %1506 = vmatpush1.bf16.msra.mxu0 %v980
    %1507 = vmatprep.subr.bf16.mxu0 0
    %1508 = vmatpush1.bf16.msra.mxu0 %v977
    %1509 = vmatprep.subr.bf16.mxu0 0
    %1510 = vmatpush1.bf16.msra.mxu0 %v974
    %1511 = vmatprep.subr.bf16.mxu0 0
    %1512 = vmatpush1.bf16.msra.mxu0 %v971
    %1513 = vmatprep.subr.bf16.mxu0 0
    %1514 = vmatpush1.bf16.msra.mxu0 %v968
    %1515 = vmatprep.subr.bf16.mxu0 0
    %1516 = vmatpush1.bf16.msra.mxu0 %v965
    %1517 = vmatprep.subr.bf16.mxu0 0
    %1518 = vmatpush1.bf16.msra.mxu0 %v962
    %1519 = vmatprep.subr.bf16.mxu0 0
    %1520 = vmatpush1.bf16.msra.mxu0 %v959
    %1521 = vmatprep.subr.bf16.mxu0 0
    %1522 = vmatpush2.bf16.msra.mxu0 %v1004
    %1523 = vmatprep.subr.bf16.mxu0 0
    %1524 = vmatpush2.bf16.msra.mxu0 %v1001
    %1525 = vmatprep.subr.bf16.mxu0 0
    %1526 = vmatpush2.bf16.msra.mxu0 %v998
    %1527 = vmatprep.subr.bf16.mxu0 0
    %1528 = vmatpush2.bf16.msra.mxu0 %v995
    %1529 = vmatprep.subr.bf16.mxu0 0
    %1530 = vmatpush2.bf16.msra.mxu0 %v992
    %1531 = vmatprep.subr.bf16.mxu0 0
    %1532 = vmatpush2.bf16.msra.mxu0 %v989
    %1533 = vmatprep.subr.bf16.mxu0 0
    %1534 = vmatpush2.bf16.msra.mxu0 %v986
    %1535 = vmatprep.subr.bf16.mxu0 0
    %1536 = vmatpush2.bf16.msra.mxu0 %v983
    %1537 = vmatprep.mubr.bf16.mxu0 %v37
    %1538 = vmatmul.mubr.bf16.gmra.mxu0 %v36
    %v1539 = vpop.f32.mrf.mxu0
    %v1540 = vadd.f32 %v313, %v1539
    %v1541 = vpop.f32.mrf.mxu0
    %v1542 = vpop.f32.mrf.mxu0
    %v1543 = vpop.f32.mrf.mxu0
    %1544 = vdwg.mxu0
    %1545 = vmatprep.subr.bf16.mxu0 0
    %1546 = vmatpush1.bf16.msra.mxu0 %v1028
    %1547 = vmatprep.subr.bf16.mxu0 0
    %1548 = vmatpush1.bf16.msra.mxu0 %v1025
    %1549 = vmatprep.subr.bf16.mxu0 0
    %1550 = vmatpush1.bf16.msra.mxu0 %v1022
    %1551 = vmatprep.subr.bf16.mxu0 0
    %1552 = vmatpush1.bf16.msra.mxu0 %v1019
    %1553 = vmatprep.subr.bf16.mxu0 0
    %1554 = vmatpush1.bf16.msra.mxu0 %v1016
    %1555 = vmatprep.subr.bf16.mxu0 0
    %1556 = vmatpush1.bf16.msra.mxu0 %v1013
    %1557 = vmatprep.subr.bf16.mxu0 0
    %1558 = vmatpush1.bf16.msra.mxu0 %v1010
    %1559 = vmatprep.subr.bf16.mxu0 0
    %1560 = vmatpush1.bf16.msra.mxu0 %v1007
    %1561 = vmatprep.subr.bf16.mxu0 0
    %1562 = vmatpush2.bf16.msra.mxu0 %v1052
    %1563 = vmatprep.subr.bf16.mxu0 0
    %1564 = vmatpush2.bf16.msra.mxu0 %v1049
    %1565 = vmatprep.subr.bf16.mxu0 0
    %1566 = vmatpush2.bf16.msra.mxu0 %v1046
    %1567 = vmatprep.subr.bf16.mxu0 0
    %1568 = vmatpush2.bf16.msra.mxu0 %v1043
    %1569 = vmatprep.subr.bf16.mxu0 0
    %1570 = vmatpush2.bf16.msra.mxu0 %v1040
    %1571 = vmatprep.subr.bf16.mxu0 0
    %1572 = vmatpush2.bf16.msra.mxu0 %v1037
    %1573 = vmatprep.subr.bf16.mxu0 0
    %1574 = vmatpush2.bf16.msra.mxu0 %v1034
    %1575 = vmatprep.subr.bf16.mxu0 0
    %1576 = vmatpush2.bf16.msra.mxu0 %v1031
    %1577 = vmatprep.mubr.bf16.mxu0 %v39
    %1578 = vmatmul.mubr.bf16.gmra.mxu0 %v38
    %v1579 = vpop.f32.mrf.mxu0
    %v1580 = vadd.f32 %v1540, %v1579
    %v1581 = vpop.f32.mrf.mxu0
    %v1582 = vpop.f32.mrf.mxu0
    %v1583 = vpop.f32.mrf.mxu0
    %1584 = vdwg.mxu0
    %1585 = vmatprep.subr.bf16.mxu0 0
    %1586 = vmatpush1.bf16.msra.mxu0 %v1076
    %1587 = vmatprep.subr.bf16.mxu0 0
    %1588 = vmatpush1.bf16.msra.mxu0 %v1073
    %1589 = vmatprep.subr.bf16.mxu0 0
    %1590 = vmatpush1.bf16.msra.mxu0 %v1070
    %1591 = vmatprep.subr.bf16.mxu0 0
    %1592 = vmatpush1.bf16.msra.mxu0 %v1067
    %1593 = vmatprep.subr.bf16.mxu0 0
    %1594 = vmatpush1.bf16.msra.mxu0 %v1064
    %1595 = vmatprep.subr.bf16.mxu0 0
    %1596 = vmatpush1.bf16.msra.mxu0 %v1061
    %1597 = vmatprep.subr.bf16.mxu0 0
    %1598 = vmatpush1.bf16.msra.mxu0 %v1058
    %1599 = vmatprep.subr.bf16.mxu0 0
    %1600 = vmatpush1.bf16.msra.mxu0 %v1055
    %1601 = vmatprep.subr.bf16.mxu0 0
    %1602 = vmatpush2.bf16.msra.mxu0 %v1100
    %1603 = vmatprep.subr.bf16.mxu0 0
    %1604 = vmatpush2.bf16.msra.mxu0 %v1097
    %1605 = vmatprep.subr.bf16.mxu0 0
    %1606 = vmatpush2.bf16.msra.mxu0 %v1094
    %1607 = vmatprep.subr.bf16.mxu0 0
    %1608 = vmatpush2.bf16.msra.mxu0 %v1091
    %1609 = vmatprep.subr.bf16.mxu0 0
    %1610 = vmatpush2.bf16.msra.mxu0 %v1088
    %1611 = vmatprep.subr.bf16.mxu0 0
    %1612 = vmatpush2.bf16.msra.mxu0 %v1085
    %1613 = vmatprep.subr.bf16.mxu0 0
    %1614 = vmatpush2.bf16.msra.mxu0 %v1082
    %1615 = vmatprep.subr.bf16.mxu0 0
    %1616 = vmatpush2.bf16.msra.mxu0 %v1079
    %1617 = vmatprep.mubr.bf16.mxu0 %v41
    %1618 = vmatmul.mubr.bf16.gmra.mxu0 %v40
    %v1619 = vpop.f32.mrf.mxu0
    %v1620 = vadd.f32 %v1580, %v1619
    %v1621 = vpop.f32.mrf.mxu0
    %v1622 = vpop.f32.mrf.mxu0
    %v1623 = vpop.f32.mrf.mxu0
    %1624 = vdwg.mxu0
    %1625 = vmatprep.subr.bf16.mxu0 0
    %1626 = vmatpush1.bf16.msra.mxu0 %v1124
    %1627 = vmatprep.subr.bf16.mxu0 0
    %1628 = vmatpush1.bf16.msra.mxu0 %v1121
    %1629 = vmatprep.subr.bf16.mxu0 0
    %1630 = vmatpush1.bf16.msra.mxu0 %v1118
    %1631 = vmatprep.subr.bf16.mxu0 0
    %1632 = vmatpush1.bf16.msra.mxu0 %v1115
    %1633 = vmatprep.subr.bf16.mxu0 0
    %1634 = vmatpush1.bf16.msra.mxu0 %v1112
    %1635 = vmatprep.subr.bf16.mxu0 0
    %1636 = vmatpush1.bf16.msra.mxu0 %v1109
    %1637 = vmatprep.subr.bf16.mxu0 0
    %1638 = vmatpush1.bf16.msra.mxu0 %v1106
    %1639 = vmatprep.subr.bf16.mxu0 0
    %1640 = vmatpush1.bf16.msra.mxu0 %v1103
    %1641 = vmatprep.subr.bf16.mxu0 0
    %1642 = vmatpush2.bf16.msra.mxu0 %v1148
    %1643 = vmatprep.subr.bf16.mxu0 0
    %1644 = vmatpush2.bf16.msra.mxu0 %v1145
    %1645 = vmatprep.subr.bf16.mxu0 0
    %1646 = vmatpush2.bf16.msra.mxu0 %v1142
    %1647 = vmatprep.subr.bf16.mxu0 0
    %1648 = vmatpush2.bf16.msra.mxu0 %v1139
    %1649 = vmatprep.subr.bf16.mxu0 0
    %1650 = vmatpush2.bf16.msra.mxu0 %v1136
    %1651 = vmatprep.subr.bf16.mxu0 0
    %1652 = vmatpush2.bf16.msra.mxu0 %v1133
    %1653 = vmatprep.subr.bf16.mxu0 0
    %1654 = vmatpush2.bf16.msra.mxu0 %v1130
    %1655 = vmatprep.subr.bf16.mxu0 0
    %1656 = vmatpush2.bf16.msra.mxu0 %v1127
    %1657 = vmatprep.mubr.bf16.mxu0 %v43
    %1658 = vmatmul.mubr.bf16.gmra.mxu0 %v42
    %v1659 = vpop.f32.mrf.mxu0
    %v1660 = vadd.f32 %v1620, %v1659
    %v1661 = vpop.f32.mrf.mxu0
    %v1662 = vpop.f32.mrf.mxu0
    %v1663 = vpop.f32.mrf.mxu0
    %1664 = vdwg.mxu0
    %v1665 = vmax.f32 %v1499, 0.0
    %v1666 = vmax.f32 %v1501, 0.0
    %v1667 = vmax.f32 %v1660, 0.0
    %v1668 = vpack.c.bf16 %v1665, %v1665
    %v1669 = vpack.c.bf16 %v1666, %v1666
    %v1670 = vpack.c.bf16 %v1667, %v1667
    %v1671 = vld [vmem:[%s3] sm:$0xf]
    %v1672 = vld [vmem:[%s3 + $0x4] sm:$0xf]
    %v1673 = vld [vmem:[%s3 + $0x8] sm:$0xf]
    %v1674 = vld [vmem:[%s3 + $0xc] sm:$0xf]
    %v1675 = vld [vmem:[%s3 + $0x10] sm:$0xf]
    %v1676 = vld [vmem:[%s3 + $0x14] sm:$0xf]
    %v1677 = vld [vmem:[%s3 + $0x18] sm:$0xf]
    %v1678 = vld [vmem:[%s3 + $0x1c] sm:$0xf]
    %v1679 = vld [vmem:[%s3 + $0x20] sm:$0xf]
    %v1680 = vld [vmem:[%s3 + $0x24] sm:$0xf]
    %v1681 = vld [vmem:[%s3 + $0x28] sm:$0xf]
    %v1682 = vld [vmem:[%s3 + $0x2c] sm:$0xf]
    %v1683 = vld [vmem:[%s3 + $0x30] sm:$0xf]
    %v1684 = vld [vmem:[%s3 + $0x34] sm:$0xf]
    %v1685 = vld [vmem:[%s3 + $0x38] sm:$0xf]
    %v1686 = vld [vmem:[%s3 + $0x3c] sm:$0xf]
    %v1687 = vld [vmem:[%s3 + $0x40] sm:$0xf]
    %v1688 = vld [vmem:[%s3 + $0x44] sm:$0xf]
    %v1689 = vld [vmem:[%s3 + $0x48] sm:$0xf]
    %v1690 = vld [vmem:[%s3 + $0x4c] sm:$0xf]
    %v1691 = vld [vmem:[%s3 + $0x50] sm:$0xf]
    %v1692 = vld [vmem:[%s3 + $0x54] sm:$0xf]
    %v1693 = vld [vmem:[%s3 + $0x58] sm:$0xf]
    %v1694 = vld [vmem:[%s3 + $0x5c] sm:$0xf]
    %v1695 = vld [vmem:[%s3 + $0x60] sm:$0xf]
    %v1696 = vld [vmem:[%s3 + $0x64] sm:$0xf]
    %v1697 = vld [vmem:[%s3 + $0x68] sm:$0xf]
    %v1698 = vld [vmem:[%s3 + $0x6c] sm:$0xf]
    %v1699 = vld [vmem:[%s3 + $0x70] sm:$0xf]
    %v1700 = vld [vmem:[%s3 + $0x74] sm:$0xf]
    %v1701 = vld [vmem:[%s3 + $0x78] sm:$0xf]
    %v1702 = vld [vmem:[%s3 + $0x7c] sm:$0xf]
    %v1703 = vld [vmem:[%s3 + $0x80] sm:$0xf]
    %v1704 = vld [vmem:[%s3 + $0x84] sm:$0xf]
    %v1705 = vld [vmem:[%s3 + $0x88] sm:$0xf]
    %v1706 = vld [vmem:[%s3 + $0x8c] sm:$0xf]
    %v1707 = vld [vmem:[%s3 + $0x90] sm:$0xf]
    %v1708 = vld [vmem:[%s3 + $0x94] sm:$0xf]
    %v1709 = vld [vmem:[%s3 + $0x98] sm:$0xf]
    %v1710 = vld [vmem:[%s3 + $0x9c] sm:$0xf]
    %v1711 = vld [vmem:[%s4] sm:$0x1]
    %v1713 = vlaneseq
    %v1714 = vshrl.u32 %v1713, 7
    %v1715 = vsub.s32 0, %v1714
    %v1716 = vrot.slane %v1711, %v1715
    %v1758 = vunpack.c.l.b16 %v1671
    %v1759 = vunpack.c.l.b16 %v1672
    %v1760 = vunpack.c.l.b16 %v1673
    %v1761 = vunpack.c.l.b16 %v1674
    %v1762 = vunpack.c.l.b16 %v1675
    %v1763 = vunpack.c.l.b16 %v1676
    %v1764 = vunpack.c.l.b16 %v1677
    %v1765 = vunpack.c.l.b16 %v1678
    %v1766 = vunpack.c.l.b16 %v1679
    %v1767 = vunpack.c.l.b16 %v1680
    %v1768 = vunpack.c.l.b16 %v1681
    %v1769 = vunpack.c.l.b16 %v1682
    %v1770 = vunpack.c.l.b16 %v1683
    %v1771 = vunpack.c.l.b16 %v1684
    %v1772 = vunpack.c.l.b16 %v1685
    %v1773 = vunpack.c.l.b16 %v1686
    %v1774 = vunpack.c.l.b16 %v1687
    %v1775 = vunpack.c.l.b16 %v1688
    %v1776 = vunpack.c.l.b16 %v1689
    %v1777 = vunpack.c.l.b16 %v1690
    %v1778 = vunpack.c.l.b16 %v1691
    %v1779 = vunpack.c.l.b16 %v1692
    %v1780 = vunpack.c.l.b16 %v1693
    %v1781 = vunpack.c.l.b16 %v1694
    %v1782 = vunpack.c.l.b16 %v1695
    %v1783 = vunpack.c.l.b16 %v1696
    %v1784 = vunpack.c.l.b16 %v1697
    %v1785 = vunpack.c.l.b16 %v1698
    %v1786 = vunpack.c.l.b16 %v1699
    %v1787 = vunpack.c.l.b16 %v1700
    %v1788 = vunpack.c.l.b16 %v1701
    %v1789 = vunpack.c.l.b16 %v1702
    %v1790 = vunpack.c.l.b16 %v1703
    %v1791 = vunpack.c.l.b16 %v1704
    %v1792 = vunpack.c.l.b16 %v1705
    %v1793 = vunpack.c.l.b16 %v1706
    %v1794 = vunpack.c.l.b16 %v1707
    %v1795 = vunpack.c.l.b16 %v1708
    %v1796 = vunpack.c.l.b16 %v1709
    %v1797 = vunpack.c.l.b16 %v1710
    %v1798 = vpack.c.b16 %v1759, %v1758
    %v1799 = vpack.c.b16 %v1761, %v1760
    %v1800 = vpack.c.b16 %v1763, %v1762
    %v1801 = vpack.c.b16 %v1765, %v1764
    %v1802 = vpack.c.b16 %v1767, %v1766
    %v1803 = vpack.c.b16 %v1769, %v1768
    %v1804 = vpack.c.b16 %v1771, %v1770
    %v1805 = vpack.c.b16 %v1773, %v1772
    %v1806 = vpack.c.b16 %v1775, %v1774
    %v1807 = vpack.c.b16 %v1777, %v1776
    %v1808 = vpack.c.b16 %v1779, %v1778
    %v1809 = vpack.c.b16 %v1781, %v1780
    %v1810 = vpack.c.b16 %v1783, %v1782
    %v1811 = vpack.c.b16 %v1785, %v1784
    %v1812 = vpack.c.b16 %v1787, %v1786
    %v1813 = vpack.c.b16 %v1789, %v1788
    %v1814 = vpack.c.b16 %v1791, %v1790
    %v1815 = vpack.c.b16 %v1793, %v1792
    %v1816 = vpack.c.b16 %v1795, %v1794
    %v1817 = vpack.c.b16 %v1797, %v1796
    %vm1838 = vcmask 523264
    %v1840 = vsel %vm1838, %v1670, 0
    %1842 = vmatprep.subr.bf16.mxu0 0
    %1843 = vmatpush1.bf16.msra.mxu0 %v1805
    %1844 = vmatprep.subr.bf16.mxu0 0
    %1845 = vmatpush1.bf16.msra.mxu0 %v1804
    %1846 = vmatprep.subr.bf16.mxu0 0
    %1847 = vmatpush1.bf16.msra.mxu0 %v1803
    %1848 = vmatprep.subr.bf16.mxu0 0
    %1849 = vmatpush1.bf16.msra.mxu0 %v1802
    %1850 = vmatprep.subr.bf16.mxu0 0
    %1851 = vmatpush1.bf16.msra.mxu0 %v1801
    %1852 = vmatprep.subr.bf16.mxu0 0
    %1853 = vmatpush1.bf16.msra.mxu0 %v1800
    %1854 = vmatprep.subr.bf16.mxu0 0
    %1855 = vmatpush1.bf16.msra.mxu0 %v1799
    %1856 = vmatprep.subr.bf16.mxu0 0
    %1857 = vmatpush1.bf16.msra.mxu0 %v1798
    %1858 = vmatprep.subr.bf16.mxu0 0
    %1859 = vmatpush2.bf16.msra.mxu0 %v1813
    %1860 = vmatprep.subr.bf16.mxu0 0
    %1861 = vmatpush2.bf16.msra.mxu0 %v1812
    %1862 = vmatprep.subr.bf16.mxu0 0
    %1863 = vmatpush2.bf16.msra.mxu0 %v1811
    %1864 = vmatprep.subr.bf16.mxu0 0
    %1865 = vmatpush2.bf16.msra.mxu0 %v1810
    %1866 = vmatprep.subr.bf16.mxu0 0
    %1867 = vmatpush2.bf16.msra.mxu0 %v1809
    %1868 = vmatprep.subr.bf16.mxu0 0
    %1869 = vmatpush2.bf16.msra.mxu0 %v1808
    %1870 = vmatprep.subr.bf16.mxu0 0
    %1871 = vmatpush2.bf16.msra.mxu0 %v1807
    %1872 = vmatprep.subr.bf16.mxu0 0
    %1873 = vmatpush2.bf16.msra.mxu0 %v1806
    %1874 = vmatprep.mubr.bf16.mxu0 %v1669
    %1875 = vmatmul.mubr.bf16.gmra.mxu0 %v1668
    %v1876 = vpop.f32.mrf.mxu0
    %v1877 = vadd.f32 %v1716, %v1876
    %v1878 = vpop.f32.mrf.mxu0
    %v1879 = vpop.f32.mrf.mxu0
    %v1880 = vpop.f32.mrf.mxu0
    %1881 = vdwg.mxu0
    %1882 = vmatprep.subr.bf16.mxu0 0
    %1883 = vmatpush1.bf16.msra.mxu0 0
    %1884 = vmatprep.subr.bf16.mxu0 0
    %1885 = vmatpush1.bf16.msra.mxu0 0
    %1886 = vmatprep.subr.bf16.mxu0 0
    %1887 = vmatpush1.bf16.msra.mxu0 0
    %1888 = vmatprep.subr.bf16.mxu0 0
    %1889 = vmatpush1.bf16.msra.mxu0 0
    %1890 = vmatprep.subr.bf16.mxu0 0
    %1891 = vmatpush1.bf16.msra.mxu0 %v1817
    %1892 = vmatprep.subr.bf16.mxu0 0
    %1893 = vmatpush1.bf16.msra.mxu0 %v1816
    %1894 = vmatprep.subr.bf16.mxu0 0
    %1895 = vmatpush1.bf16.msra.mxu0 %v1815
    %1896 = vmatprep.subr.bf16.mxu0 0
    %1897 = vmatpush1.bf16.msra.mxu0 %v1814
    %1898 = vmatprep.subr.bf16.mxu0 0
    %1899 = vmatpush2.bf16.msra.mxu0 0
    %1900 = vmatprep.subr.bf16.mxu0 0
    %1901 = vmatpush2.bf16.msra.mxu0 0
    %1902 = vmatprep.subr.bf16.mxu0 0
    %1903 = vmatpush2.bf16.msra.mxu0 0
    %1904 = vmatprep.subr.bf16.mxu0 0
    %1905 = vmatpush2.bf16.msra.mxu0 0
    %1906 = vmatprep.subr.bf16.mxu0 0
    %1907 = vmatpush2.bf16.msra.mxu0 0
    %1908 = vmatprep.subr.bf16.mxu0 0
    %1909 = vmatpush2.bf16.msra.mxu0 0
    %1910 = vmatprep.subr.bf16.mxu0 0
    %1911 = vmatpush2.bf16.msra.mxu0 0
    %1912 = vmatprep.subr.bf16.mxu0 0
    %1913 = vmatpush2.bf16.msra.mxu0 0
    %1914 = vmatprep.mubr.bf16.mxu0 0
    %1915 = vmatmul.mubr.bf16.gmra.mxu0 %v1840
    %v1916 = vpop.f32.mrf.mxu0
    %v1917 = vadd.f32 %v1877, %v1916
    %v1918 = vpop.f32.mrf.mxu0
    %v1919 = vpop.f32.mrf.mxu0
    %v1920 = vpop.f32.mrf.mxu0
    %1921 = vdwg.mxu0
    %v1922 = vmax.f32 %v1917, 0.0
    %v1923 = vpack.c.bf16 %v1922, %v1922
    %v1924 = vld [vmem:[%s5] sm:$0xf]
    %v1925 = vld [vmem:[%s5 + $0x4] sm:$0xf]
    %v1926 = vld [vmem:[%s5 + $0x8] sm:$0xf]
    %v1927 = vld [vmem:[%s5 + $0xc] sm:$0xf]
    %v1928 = vld [vmem:[%s5 + $0x10] sm:$0xf]
    %v1929 = vld [vmem:[%s5 + $0x14] sm:$0xf]
    %v1930 = vld [vmem:[%s5 + $0x18] sm:$0xf]
    %v1931 = vld [vmem:[%s5 + $0x1c] sm:$0xf]
    %v1932 = vld [vmem:[%s5 + $0x20] sm:$0xf]
    %v1933 = vld [vmem:[%s5 + $0x24] sm:$0xf]
    %v1934 = vld [vmem:[%s5 + $0x28] sm:$0xf]
    %v1935 = vld [vmem:[%s5 + $0x2c] sm:$0xf]
    %v1936 = vld [vmem:[%s5 + $0x30] sm:$0xf]
    %v1937 = vld [vmem:[%s5 + $0x34] sm:$0xf]
    %v1938 = vld [vmem:[%s5 + $0x38] sm:$0xf]
    %v1939 = vld [vmem:[%s5 + $0x3c] sm:$0xf]
    %v1940 = vld [vmem:[%s6] sm:$0x1]
    %v1942 = vlaneseq
    %v1943 = vshrl.u32 %v1942, 7
    %v1944 = vsub.s32 0, %v1943
    %v1945 = vrot.slane %v1940, %v1944
    %v1963 = vunpack.c.l.b16 %v1924
    %v1964 = vunpack.c.l.b16 %v1925
    %v1965 = vunpack.c.l.b16 %v1926
    %v1966 = vunpack.c.l.b16 %v1927
    %v1967 = vunpack.c.l.b16 %v1928
    %v1968 = vunpack.c.l.b16 %v1929
    %v1969 = vunpack.c.l.b16 %v1930
    %v1970 = vunpack.c.l.b16 %v1931
    %v1971 = vunpack.c.l.b16 %v1932
    %v1972 = vunpack.c.l.b16 %v1933
    %v1973 = vunpack.c.l.b16 %v1934
    %v1974 = vunpack.c.l.b16 %v1935
    %v1975 = vunpack.c.l.b16 %v1936
    %v1976 = vunpack.c.l.b16 %v1937
    %v1977 = vunpack.c.l.b16 %v1938
    %v1978 = vunpack.c.l.b16 %v1939
    %v1979 = vpack.c.b16 %v1964, %v1963
    %v1980 = vpack.c.b16 %v1966, %v1965
    %v1981 = vpack.c.b16 %v1968, %v1967
    %v1982 = vpack.c.b16 %v1970, %v1969
    %v1983 = vpack.c.b16 %v1972, %v1971
    %v1984 = vpack.c.b16 %v1974, %v1973
    %v1985 = vpack.c.b16 %v1976, %v1975
    %v1986 = vpack.c.b16 %v1978, %v1977
    %1995 = vmatprep.subr.bf16.mxu0 0
    %1996 = vmatpush1.bf16.msra.mxu0 %v1986
    %1997 = vmatprep.subr.bf16.mxu0 0
    %1998 = vmatpush1.bf16.msra.mxu0 %v1985
    %1999 = vmatprep.subr.bf16.mxu0 0
    %2000 = vmatpush1.bf16.msra.mxu0 %v1984
    %2001 = vmatprep.subr.bf16.mxu0 0
    %2002 = vmatpush1.bf16.msra.mxu0 %v1983
    %2003 = vmatprep.subr.bf16.mxu0 0
    %2004 = vmatpush1.bf16.msra.mxu0 %v1982
    %2005 = vmatprep.subr.bf16.mxu0 0
    %2006 = vmatpush1.bf16.msra.mxu0 %v1981
    %2007 = vmatprep.subr.bf16.mxu0 0
    %2008 = vmatpush1.bf16.msra.mxu0 %v1980
    %2009 = vmatprep.subr.bf16.mxu0 0
    %2010 = vmatpush1.bf16.msra.mxu0 %v1979
    %2011 = vmatprep.subr.bf16.mxu0 0
    %2012 = vmatpush2.bf16.msra.mxu0 0
    %2013 = vmatprep.subr.bf16.mxu0 0
    %2014 = vmatpush2.bf16.msra.mxu0 0
    %2015 = vmatprep.subr.bf16.mxu0 0
    %2016 = vmatpush2.bf16.msra.mxu0 0
    %2017 = vmatprep.subr.bf16.mxu0 0
    %2018 = vmatpush2.bf16.msra.mxu0 0
    %2019 = vmatprep.subr.bf16.mxu0 0
    %2020 = vmatpush2.bf16.msra.mxu0 0
    %2021 = vmatprep.subr.bf16.mxu0 0
    %2022 = vmatpush2.bf16.msra.mxu0 0
    %2023 = vmatprep.subr.bf16.mxu0 0
    %2024 = vmatpush2.bf16.msra.mxu0 0
    %2025 = vmatprep.subr.bf16.mxu0 0
    %2026 = vmatpush2.bf16.msra.mxu0 0
    %2027 = vmatprep.mubr.bf16.mxu0 0
    %2028 = vmatmul.mubr.bf16.gmra.mxu0 %v1923
    %v2029 = vpop.f32.mrf.mxu0
    %v2030 = vadd.f32 %v1945, %v2029
    %v2031 = vpop.f32.mrf.mxu0
    %v2032 = vpop.f32.mrf.mxu0
    %v2033 = vpop.f32.mrf.mxu0
    %2034 = vdwg.mxu0
    %2035 = vst [vmem:[#allocation2] sm:$0xff] %v2030
    // Predicated region
    $region30: #{tpu_custom_call.1} parent=1 // pred_check
      _
    $region31: #{tpu_custom_call.1} parent=1 // pred_check_branch
      %2037 = sbr.rel (0) target = $region33
    $region32: #{tpu_custom_call.1} parent=1 // pred_region
      %s2039 = ssub.s32 128, 128
      %2040 = vsyncadd [#allocation3], %s2039
      %s2042 = sshll.u32 [#allocation2], 4
      %s2043 = int_to_ptr.vmem [resolvable:$true] %s2042
      %2045 = dma.vmem_to_hbm [thread:$0]  %s2043, 128, %s7, [#allocation3]
    $region33: #{tpu_custom_call.1} parent=1 // pred_fallthru
      _
    // Predicated region
    $region34: #{tpu_custom_call.1} parent=1 // pred_check
      _
    $region35: #{tpu_custom_call.1} parent=1 // pred_check_branch
      %2047 = sbr.rel (0) target = $region37
    $region36: #{tpu_custom_call.1} parent=1 // pred_region
      %2048 = dma.done [#allocation3], 128
    $region37: #{tpu_custom_call.1} parent=1 // pred_fallthru
      _
    %2049 = vsyncpa [#allocation3], 1

</llo_original>
